<compile_context>
chip_gen: v7x
topology: tpu7x:2x2x1
jax: 0.10.0
libtpu: 0.0.40
codegen_flags: <defaults>
</compile_context>

<pallas_src>
import functools

import jax
import jax.numpy as jnp
from jax.experimental import pallas as pl
from jax.experimental.pallas import tpu as pltpu

KSIZE = 7
PAD = 3


def spatial_attn_kernel(w_ref, m_ref, x_ref, o_ref, *, W):
    # w_ref : SMEM (98,) f32 conv weights, [in_ch (0=avg with 1/C folded in,
    #         1=max), ky, kx]
    # m_ref : VMEM (14, HW) f32 boundary masks: rows 0..6 = column masks per kx,
    #         rows 7..13 = row masks per ky.
    # x_ref / o_ref : VMEM (NB, C, HW)  (lane-dense flattened spatial dim)
    NB, C, HW = x_ref.shape

    # ---- fused per-channel f32 sum + running max (no full-block f32 copy) ----
    xc = x_ref[:, 0, :].astype(jnp.float32)
    ssum = xc
    smax = xc
    for c in range(1, C):
        xc = x_ref[:, c, :].astype(jnp.float32)
        ssum = ssum + xc
        smax = jnp.maximum(smax, xc)
    # (1/C of the mean is folded into the avg-path weights on the host.)

    # ---- hoist the 98 SMEM scalar weight reads and the 14 tiny mask loads ----
    wa = [[w_ref[ky * KSIZE + kx] for kx in range(KSIZE)] for ky in range(KSIZE)]
    wm = [[w_ref[KSIZE * KSIZE + ky * KSIZE + kx] for kx in range(KSIZE)]
          for ky in range(KSIZE)]
    cmask = [m_ref[kx:kx + 1, :] for kx in range(KSIZE)]            # (1, HW)
    rmask = [m_ref[KSIZE + ky:KSIZE + ky + 1, :] for ky in range(KSIZE)]

    # ---- 7x7 2->1 conv via lane rolls (XLU) + host-precomputed masks ---------
    # kx rolls are recomputed per ky (bounds the live plane count to ~7 f32
    # (NB, HW) planes; the extra rolls ride the XLU slots which have slack).
    acc = jnp.zeros((NB, HW), jnp.float32)
    for ky in range(KSIZE):
        dy = ky - PAD
        v = jnp.zeros((NB, HW), jnp.float32)
        for kx in range(KSIZE):
            dx = kx - PAD
            if dx == 0:
                a_kx, m_kx = ssum, smax
            else:
                sh = (-dx) % HW                          # static non-negative
                a_kx = pltpu.roll(ssum, shift=sh, axis=1) * cmask[kx]
                m_kx = pltpu.roll(smax, shift=sh, axis=1) * cmask[kx]
            v = v + wa[ky][kx] * a_kx + wm[ky][kx] * m_kx
        if dy == 0:
            acc = acc + v
        else:
            shr = (-(dy * W)) % HW
            acc = acc + pltpu.roll(v, shift=shr, axis=1) * rmask[ky]

    # sigmoid via EUP exp + EUP approximate reciprocal (keeps the VALU free)
    sig = pl.reciprocal(1.0 + jnp.exp(-acc), approx=True)           # (NB, HW)

    # ---- per-channel gate: upcast, multiply in f32, downcast once at store ---
    for c in range(C):
        o_ref[:, c, :] = (x_ref[:, c, :].astype(jnp.float32) * sig).astype(o_ref.dtype)


def _boundary_masks(H, W):
    """(2*7, H*W) f32: column-validity per kx shift, row-validity per ky shift."""
    HW = H * W
    lane = jnp.arange(HW, dtype=jnp.int32)
    col = lane % W
    row = lane // W
    cm = [((col + (kx - PAD) >= 0) & (col + (kx - PAD) < W)) for kx in range(KSIZE)]
    rm = [((row + (ky - PAD) >= 0) & (row + (ky - PAD) < H)) for ky in range(KSIZE)]
    return jnp.stack(cm + rm).astype(jnp.float32)


def _spatial_attention_xla(x, w):
    """Plain-XLA fallback (also used as the correctness reference)."""
    avg = jnp.mean(x, axis=1, keepdims=True)
    mx = jnp.max(x, axis=1, keepdims=True)
    cat = jnp.concatenate([avg, mx], axis=1)                        # (N, 2, H, W)
    conv = jax.lax.conv_general_dilated(
        cat, w[None].astype(x.dtype),
        window_strides=(1, 1), padding=[(PAD, PAD), (PAD, PAD)],
        dimension_numbers=("NCHW", "OIHW", "NCHW"))
    return x * jax.nn.sigmoid(conv)


def spatial_attention(x, w, *, max_block_bytes=8 * 1024 * 1024, min_grid_steps=2):
    """x: (N, C, H, W); w: (2, 7, 7) weight of Conv2d(2, 1, 7, padding=3, bias=False).

    max_block_bytes budgets double-buffered I/O blocks + in-kernel f32
    temporaries per grid step; raise it (e.g. 16 MiB, together with
    vmem_limit_bytes) on v5e/v6e (128 MiB VMEM), keep <= ~8 MiB on v7x.
    """
    N, C, H, W = x.shape
    HW = H * W

    # Deep-UNet stages with HW < 128 can't fill the 128-lane vregs; the
    # per-step overhead + masked stores make XLA the better choice there.
    if HW < 128:
        return _spatial_attention_xla(x, w)

    x_flat = x.reshape(N, C, HW)                     # lane-dense layout
    # Fold 1/C of the channel mean into the avg-path weights (linear, commutes
    # with the conv) so the kernel only needs the raw channel sum.
    w = w.astype(jnp.float32)
    w_flat = jnp.concatenate([w[0].reshape(-1) / C, w[1].reshape(-1)])
    masks = _boundary_masks(H, W)                    # (14, HW) f32

    # ---- honest per-grid-step VMEM budget ------------------------------------
    itemsize = jnp.dtype(x.dtype).itemsize
    io_bytes = 4 * C * HW * itemsize                 # double-buffered in + out
    tmp_bytes = 10 * HW * 4                          # live f32 working planes
    per_batch = io_bytes + tmp_bytes
    budget = max_block_bytes - 14 * HW * 4           # grid-invariant masks block
    nb_fit = max(1, min(N, budget // max(per_batch, 1)))
    # Keep at least `min_grid_steps` grid steps when N allows so v7x's two
    # TensorCores both get work (grid axis is "parallel").
    nb_cap = max(1, -(-N // min_grid_steps))
    nb = int(max(1, min(nb_fit, nb_cap)))
    grid = (pl.cdiv(N, nb),)                         # ragged last block is OK

    kernel = functools.partial(spatial_attn_kernel, W=W)
    out = pl.pallas_call(
        kernel,
        out_shape=jax.ShapeDtypeStruct((N, C, HW), x.dtype),
        grid=grid,
        in_specs=[
            pl.BlockSpec(memory_space=pltpu.SMEM),               # 98 conv weights
            pl.BlockSpec((2 * KSIZE, HW), lambda n: (0, 0)),     # boundary masks
            pl.BlockSpec((nb, C, HW), lambda n: (n, 0, 0)),      # nb batch elems
        ],
        out_specs=pl.BlockSpec((nb, C, HW), lambda n: (n, 0, 0)),
        compiler_params=pltpu.CompilerParams(
            dimension_semantics=("parallel",),
            vmem_limit_bytes=32 * 1024 * 1024,       # raise alongside max_block_bytes
        ),
    )(w_flat, masks, x_flat)
    return out.reshape(N, C, H, W)


if __name__ == "__main__":
    key = jax.random.PRNGKey(0)
    k_x, k_w = jax.random.split(key)

    N, C, H, W = 2, 4, 16, 16
    x = jax.random.normal(k_x, (N, C, H, W), dtype=jnp.float32)

    # Deterministic Conv2d(2, 1, 7, bias=False) init: U(-1/sqrt(fan_in), 1/sqrt(fan_in))
    fan_in = 2 * KSIZE * KSIZE
    bound = 1.0 / (fan_in ** 0.5)
    w = jax.random.uniform(k_w, (2, KSIZE, KSIZE), jnp.float32, -bound, bound)

    out = spatial_attention(x, w)
    out = jax.block_until_ready(out)

    ref = _spatial_attention_xla(x, w)
    assert out.shape == (N, C, H, W)
    # Tolerance covers the EUP approximate-reciprocal sigmoid; any structural /
    # indexing error in the conv would produce O(0.1+) deviations.
    assert jnp.allclose(out, ref, atol=5e-3, rtol=5e-3), "mismatch vs reference"

    print("KERNEL_OK")
</pallas_src>

<mosaic_0001>
module attributes {stable_mosaic.version = 11 : i64} {
  func.func @spatial_attn_kernel(%arg0: i32, %arg1: memref<98xf32, #tpu.memory_space<smem>>, %arg2: memref<14x256xf32, #tpu.memory_space<vmem>>, %arg3: memref<1x4x256xf32, #tpu.memory_space<vmem>>, %arg4: memref<1x4x256xf32, #tpu.memory_space<vmem>>) attributes {dimension_semantics = [#tpu.dimension_semantics<parallel>], iteration_bounds = array<i64: 2>, scalar_prefetch = 0 : i64, scratch_operands = 0 : i64, tpu.core_type = #tpu.core_type<tc>, window_params = [{transform_indices = @transform_0, window_bounds = array<i64: 98>}, {pipeline_mode = #tpu.pipeline_mode<synchronous>, transform_indices = @transform_1, window_bounds = array<i64: 14, 256>}, {transform_indices = @transform_2, window_bounds = array<i64: 1, 4, 256>}, {transform_indices = @transform_3, window_bounds = array<i64: 1, 4, 256>}]} {
    %c0 = arith.constant 0 : index
    %c0_0 = arith.constant 0 : index
    %c0_1 = arith.constant 0 : index
    %0 = vector.load %arg3[%c0, %c0_0, %c0_1] : memref<1x4x256xf32, #tpu.memory_space<vmem>>, vector<1x1x256xf32>
    %1 = vector.shape_cast %0 : vector<1x1x256xf32> to vector<1x256xf32>
    %c0_2 = arith.constant 0 : index
    %c1 = arith.constant 1 : index
    %c0_3 = arith.constant 0 : index
    %2 = vector.load %arg3[%c0_2, %c1, %c0_3] : memref<1x4x256xf32, #tpu.memory_space<vmem>>, vector<1x1x256xf32>
    %3 = vector.shape_cast %2 : vector<1x1x256xf32> to vector<1x256xf32>
    %4 = arith.addf %1, %3 : vector<1x256xf32>
    %5 = arith.maximumf %1, %3 : vector<1x256xf32>
    %c0_4 = arith.constant 0 : index
    %c2 = arith.constant 2 : index
    %c0_5 = arith.constant 0 : index
    %6 = vector.load %arg3[%c0_4, %c2, %c0_5] : memref<1x4x256xf32, #tpu.memory_space<vmem>>, vector<1x1x256xf32>
    %7 = vector.shape_cast %6 : vector<1x1x256xf32> to vector<1x256xf32>
    %8 = arith.addf %4, %7 : vector<1x256xf32>
    %9 = arith.maximumf %5, %7 : vector<1x256xf32>
    %c0_6 = arith.constant 0 : index
    %c3 = arith.constant 3 : index
    %c0_7 = arith.constant 0 : index
    %10 = vector.load %arg3[%c0_6, %c3, %c0_7] : memref<1x4x256xf32, #tpu.memory_space<vmem>>, vector<1x1x256xf32>
    %11 = vector.shape_cast %10 : vector<1x1x256xf32> to vector<1x256xf32>
    %12 = arith.addf %8, %11 : vector<1x256xf32>
    %13 = arith.maximumf %9, %11 : vector<1x256xf32>
    %c0_8 = arith.constant 0 : index
    %14 = memref.load %arg1[%c0_8] : memref<98xf32, #tpu.memory_space<smem>>
    %c1_9 = arith.constant 1 : index
    %15 = memref.load %arg1[%c1_9] : memref<98xf32, #tpu.memory_space<smem>>
    %c2_10 = arith.constant 2 : index
    %16 = memref.load %arg1[%c2_10] : memref<98xf32, #tpu.memory_space<smem>>
    %c3_11 = arith.constant 3 : index
    %17 = memref.load %arg1[%c3_11] : memref<98xf32, #tpu.memory_space<smem>>
    %c4 = arith.constant 4 : index
    %18 = memref.load %arg1[%c4] : memref<98xf32, #tpu.memory_space<smem>>
    %c5 = arith.constant 5 : index
    %19 = memref.load %arg1[%c5] : memref<98xf32, #tpu.memory_space<smem>>
    %c6 = arith.constant 6 : index
    %20 = memref.load %arg1[%c6] : memref<98xf32, #tpu.memory_space<smem>>
    %c7 = arith.constant 7 : index
    %21 = memref.load %arg1[%c7] : memref<98xf32, #tpu.memory_space<smem>>
    %c8 = arith.constant 8 : index
    %22 = memref.load %arg1[%c8] : memref<98xf32, #tpu.memory_space<smem>>
    %c9 = arith.constant 9 : index
    %23 = memref.load %arg1[%c9] : memref<98xf32, #tpu.memory_space<smem>>
    %c10 = arith.constant 10 : index
    %24 = memref.load %arg1[%c10] : memref<98xf32, #tpu.memory_space<smem>>
    %c11 = arith.constant 11 : index
    %25 = memref.load %arg1[%c11] : memref<98xf32, #tpu.memory_space<smem>>
    %c12 = arith.constant 12 : index
    %26 = memref.load %arg1[%c12] : memref<98xf32, #tpu.memory_space<smem>>
    %c13 = arith.constant 13 : index
    %27 = memref.load %arg1[%c13] : memref<98xf32, #tpu.memory_space<smem>>
    %c14 = arith.constant 14 : index
    %28 = memref.load %arg1[%c14] : memref<98xf32, #tpu.memory_space<smem>>
    %c15 = arith.constant 15 : index
    %29 = memref.load %arg1[%c15] : memref<98xf32, #tpu.memory_space<smem>>
    %c16 = arith.constant 16 : index
    %30 = memref.load %arg1[%c16] : memref<98xf32, #tpu.memory_space<smem>>
    %c17 = arith.constant 17 : index
    %31 = memref.load %arg1[%c17] : memref<98xf32, #tpu.memory_space<smem>>
    %c18 = arith.constant 18 : index
    %32 = memref.load %arg1[%c18] : memref<98xf32, #tpu.memory_space<smem>>
    %c19 = arith.constant 19 : index
    %33 = memref.load %arg1[%c19] : memref<98xf32, #tpu.memory_space<smem>>
    %c20 = arith.constant 20 : index
    %34 = memref.load %arg1[%c20] : memref<98xf32, #tpu.memory_space<smem>>
    %c21 = arith.constant 21 : index
    %35 = memref.load %arg1[%c21] : memref<98xf32, #tpu.memory_space<smem>>
    %c22 = arith.constant 22 : index
    %36 = memref.load %arg1[%c22] : memref<98xf32, #tpu.memory_space<smem>>
    %c23 = arith.constant 23 : index
    %37 = memref.load %arg1[%c23] : memref<98xf32, #tpu.memory_space<smem>>
    %c24 = arith.constant 24 : index
    %38 = memref.load %arg1[%c24] : memref<98xf32, #tpu.memory_space<smem>>
    %c25 = arith.constant 25 : index
    %39 = memref.load %arg1[%c25] : memref<98xf32, #tpu.memory_space<smem>>
    %c26 = arith.constant 26 : index
    %40 = memref.load %arg1[%c26] : memref<98xf32, #tpu.memory_space<smem>>
    %c27 = arith.constant 27 : index
    %41 = memref.load %arg1[%c27] : memref<98xf32, #tpu.memory_space<smem>>
    %c28 = arith.constant 28 : index
    %42 = memref.load %arg1[%c28] : memref<98xf32, #tpu.memory_space<smem>>
    %c29 = arith.constant 29 : index
    %43 = memref.load %arg1[%c29] : memref<98xf32, #tpu.memory_space<smem>>
    %c30 = arith.constant 30 : index
    %44 = memref.load %arg1[%c30] : memref<98xf32, #tpu.memory_space<smem>>
    %c31 = arith.constant 31 : index
    %45 = memref.load %arg1[%c31] : memref<98xf32, #tpu.memory_space<smem>>
    %c32 = arith.constant 32 : index
    %46 = memref.load %arg1[%c32] : memref<98xf32, #tpu.memory_space<smem>>
    %c33 = arith.constant 33 : index
    %47 = memref.load %arg1[%c33] : memref<98xf32, #tpu.memory_space<smem>>
    %c34 = arith.constant 34 : index
    %48 = memref.load %arg1[%c34] : memref<98xf32, #tpu.memory_space<smem>>
    %c35 = arith.constant 35 : index
    %49 = memref.load %arg1[%c35] : memref<98xf32, #tpu.memory_space<smem>>
    %c36 = arith.constant 36 : index
    %50 = memref.load %arg1[%c36] : memref<98xf32, #tpu.memory_space<smem>>
    %c37 = arith.constant 37 : index
    %51 = memref.load %arg1[%c37] : memref<98xf32, #tpu.memory_space<smem>>
    %c38 = arith.constant 38 : index
    %52 = memref.load %arg1[%c38] : memref<98xf32, #tpu.memory_space<smem>>
    %c39 = arith.constant 39 : index
    %53 = memref.load %arg1[%c39] : memref<98xf32, #tpu.memory_space<smem>>
    %c40 = arith.constant 40 : index
    %54 = memref.load %arg1[%c40] : memref<98xf32, #tpu.memory_space<smem>>
    %c41 = arith.constant 41 : index
    %55 = memref.load %arg1[%c41] : memref<98xf32, #tpu.memory_space<smem>>
    %c42 = arith.constant 42 : index
    %56 = memref.load %arg1[%c42] : memref<98xf32, #tpu.memory_space<smem>>
    %c43 = arith.constant 43 : index
    %57 = memref.load %arg1[%c43] : memref<98xf32, #tpu.memory_space<smem>>
    %c44 = arith.constant 44 : index
    %58 = memref.load %arg1[%c44] : memref<98xf32, #tpu.memory_space<smem>>
    %c45 = arith.constant 45 : index
    %59 = memref.load %arg1[%c45] : memref<98xf32, #tpu.memory_space<smem>>
    %c46 = arith.constant 46 : index
    %60 = memref.load %arg1[%c46] : memref<98xf32, #tpu.memory_space<smem>>
    %c47 = arith.constant 47 : index
    %61 = memref.load %arg1[%c47] : memref<98xf32, #tpu.memory_space<smem>>
    %c48 = arith.constant 48 : index
    %62 = memref.load %arg1[%c48] : memref<98xf32, #tpu.memory_space<smem>>
    %c49 = arith.constant 49 : index
    %63 = memref.load %arg1[%c49] : memref<98xf32, #tpu.memory_space<smem>>
    %c50 = arith.constant 50 : index
    %64 = memref.load %arg1[%c50] : memref<98xf32, #tpu.memory_space<smem>>
    %c51 = arith.constant 51 : index
    %65 = memref.load %arg1[%c51] : memref<98xf32, #tpu.memory_space<smem>>
    %c52 = arith.constant 52 : index
    %66 = memref.load %arg1[%c52] : memref<98xf32, #tpu.memory_space<smem>>
    %c53 = arith.constant 53 : index
    %67 = memref.load %arg1[%c53] : memref<98xf32, #tpu.memory_space<smem>>
    %c54 = arith.constant 54 : index
    %68 = memref.load %arg1[%c54] : memref<98xf32, #tpu.memory_space<smem>>
    %c55 = arith.constant 55 : index
    %69 = memref.load %arg1[%c55] : memref<98xf32, #tpu.memory_space<smem>>
    %c56 = arith.constant 56 : index
    %70 = memref.load %arg1[%c56] : memref<98xf32, #tpu.memory_space<smem>>
    %c57 = arith.constant 57 : index
    %71 = memref.load %arg1[%c57] : memref<98xf32, #tpu.memory_space<smem>>
    %c58 = arith.constant 58 : index
    %72 = memref.load %arg1[%c58] : memref<98xf32, #tpu.memory_space<smem>>
    %c59 = arith.constant 59 : index
    %73 = memref.load %arg1[%c59] : memref<98xf32, #tpu.memory_space<smem>>
    %c60 = arith.constant 60 : index
    %74 = memref.load %arg1[%c60] : memref<98xf32, #tpu.memory_space<smem>>
    %c61 = arith.constant 61 : index
    %75 = memref.load %arg1[%c61] : memref<98xf32, #tpu.memory_space<smem>>
    %c62 = arith.constant 62 : index
    %76 = memref.load %arg1[%c62] : memref<98xf32, #tpu.memory_space<smem>>
    %c63 = arith.constant 63 : index
    %77 = memref.load %arg1[%c63] : memref<98xf32, #tpu.memory_space<smem>>
    %c64 = arith.constant 64 : index
    %78 = memref.load %arg1[%c64] : memref<98xf32, #tpu.memory_space<smem>>
    %c65 = arith.constant 65 : index
    %79 = memref.load %arg1[%c65] : memref<98xf32, #tpu.memory_space<smem>>
    %c66 = arith.constant 66 : index
    %80 = memref.load %arg1[%c66] : memref<98xf32, #tpu.memory_space<smem>>
    %c67 = arith.constant 67 : index
    %81 = memref.load %arg1[%c67] : memref<98xf32, #tpu.memory_space<smem>>
    %c68 = arith.constant 68 : index
    %82 = memref.load %arg1[%c68] : memref<98xf32, #tpu.memory_space<smem>>
    %c69 = arith.constant 69 : index
    %83 = memref.load %arg1[%c69] : memref<98xf32, #tpu.memory_space<smem>>
    %c70 = arith.constant 70 : index
    %84 = memref.load %arg1[%c70] : memref<98xf32, #tpu.memory_space<smem>>
    %c71 = arith.constant 71 : index
    %85 = memref.load %arg1[%c71] : memref<98xf32, #tpu.memory_space<smem>>
    %c72 = arith.constant 72 : index
    %86 = memref.load %arg1[%c72] : memref<98xf32, #tpu.memory_space<smem>>
    %c73 = arith.constant 73 : index
    %87 = memref.load %arg1[%c73] : memref<98xf32, #tpu.memory_space<smem>>
    %c74 = arith.constant 74 : index
    %88 = memref.load %arg1[%c74] : memref<98xf32, #tpu.memory_space<smem>>
    %c75 = arith.constant 75 : index
    %89 = memref.load %arg1[%c75] : memref<98xf32, #tpu.memory_space<smem>>
    %c76 = arith.constant 76 : index
    %90 = memref.load %arg1[%c76] : memref<98xf32, #tpu.memory_space<smem>>
    %c77 = arith.constant 77 : index
    %91 = memref.load %arg1[%c77] : memref<98xf32, #tpu.memory_space<smem>>
    %c78 = arith.constant 78 : index
    %92 = memref.load %arg1[%c78] : memref<98xf32, #tpu.memory_space<smem>>
    %c79 = arith.constant 79 : index
    %93 = memref.load %arg1[%c79] : memref<98xf32, #tpu.memory_space<smem>>
    %c80 = arith.constant 80 : index
    %94 = memref.load %arg1[%c80] : memref<98xf32, #tpu.memory_space<smem>>
    %c81 = arith.constant 81 : index
    %95 = memref.load %arg1[%c81] : memref<98xf32, #tpu.memory_space<smem>>
    %c82 = arith.constant 82 : index
    %96 = memref.load %arg1[%c82] : memref<98xf32, #tpu.memory_space<smem>>
    %c83 = arith.constant 83 : index
    %97 = memref.load %arg1[%c83] : memref<98xf32, #tpu.memory_space<smem>>
    %c84 = arith.constant 84 : index
    %98 = memref.load %arg1[%c84] : memref<98xf32, #tpu.memory_space<smem>>
    %c85 = arith.constant 85 : index
    %99 = memref.load %arg1[%c85] : memref<98xf32, #tpu.memory_space<smem>>
    %c86 = arith.constant 86 : index
    %100 = memref.load %arg1[%c86] : memref<98xf32, #tpu.memory_space<smem>>
    %c87 = arith.constant 87 : index
    %101 = memref.load %arg1[%c87] : memref<98xf32, #tpu.memory_space<smem>>
    %c88 = arith.constant 88 : index
    %102 = memref.load %arg1[%c88] : memref<98xf32, #tpu.memory_space<smem>>
    %c89 = arith.constant 89 : index
    %103 = memref.load %arg1[%c89] : memref<98xf32, #tpu.memory_space<smem>>
    %c90 = arith.constant 90 : index
    %104 = memref.load %arg1[%c90] : memref<98xf32, #tpu.memory_space<smem>>
    %c91 = arith.constant 91 : index
    %105 = memref.load %arg1[%c91] : memref<98xf32, #tpu.memory_space<smem>>
    %c92 = arith.constant 92 : index
    %106 = memref.load %arg1[%c92] : memref<98xf32, #tpu.memory_space<smem>>
    %c93 = arith.constant 93 : index
    %107 = memref.load %arg1[%c93] : memref<98xf32, #tpu.memory_space<smem>>
    %c94 = arith.constant 94 : index
    %108 = memref.load %arg1[%c94] : memref<98xf32, #tpu.memory_space<smem>>
    %c95 = arith.constant 95 : index
    %109 = memref.load %arg1[%c95] : memref<98xf32, #tpu.memory_space<smem>>
    %c96 = arith.constant 96 : index
    %110 = memref.load %arg1[%c96] : memref<98xf32, #tpu.memory_space<smem>>
    %c97 = arith.constant 97 : index
    %111 = memref.load %arg1[%c97] : memref<98xf32, #tpu.memory_space<smem>>
    %c0_12 = arith.constant 0 : index
    %c0_13 = arith.constant 0 : index
    %112 = vector.load %arg2[%c0_12, %c0_13] : memref<14x256xf32, #tpu.memory_space<vmem>>, vector<1x256xf32>
    %c1_14 = arith.constant 1 : index
    %c0_15 = arith.constant 0 : index
    %113 = vector.load %arg2[%c1_14, %c0_15] : memref<14x256xf32, #tpu.memory_space<vmem>>, vector<1x256xf32>
    %c2_16 = arith.constant 2 : index
    %c0_17 = arith.constant 0 : index
    %114 = vector.load %arg2[%c2_16, %c0_17] : memref<14x256xf32, #tpu.memory_space<vmem>>, vector<1x256xf32>
    %c4_18 = arith.constant 4 : index
    %c0_19 = arith.constant 0 : index
    %115 = vector.load %arg2[%c4_18, %c0_19] : memref<14x256xf32, #tpu.memory_space<vmem>>, vector<1x256xf32>
    %c5_20 = arith.constant 5 : index
    %c0_21 = arith.constant 0 : index
    %116 = vector.load %arg2[%c5_20, %c0_21] : memref<14x256xf32, #tpu.memory_space<vmem>>, vector<1x256xf32>
    %c6_22 = arith.constant 6 : index
    %c0_23 = arith.constant 0 : index
    %117 = vector.load %arg2[%c6_22, %c0_23] : memref<14x256xf32, #tpu.memory_space<vmem>>, vector<1x256xf32>
    %c7_24 = arith.constant 7 : index
    %c0_25 = arith.constant 0 : index
    %118 = vector.load %arg2[%c7_24, %c0_25] : memref<14x256xf32, #tpu.memory_space<vmem>>, vector<1x256xf32>
    %c8_26 = arith.constant 8 : index
    %c0_27 = arith.constant 0 : index
    %119 = vector.load %arg2[%c8_26, %c0_27] : memref<14x256xf32, #tpu.memory_space<vmem>>, vector<1x256xf32>
    %c9_28 = arith.constant 9 : index
    %c0_29 = arith.constant 0 : index
    %120 = vector.load %arg2[%c9_28, %c0_29] : memref<14x256xf32, #tpu.memory_space<vmem>>, vector<1x256xf32>
    %c11_30 = arith.constant 11 : index
    %c0_31 = arith.constant 0 : index
    %121 = vector.load %arg2[%c11_30, %c0_31] : memref<14x256xf32, #tpu.memory_space<vmem>>, vector<1x256xf32>
    %c12_32 = arith.constant 12 : index
    %c0_33 = arith.constant 0 : index
    %122 = vector.load %arg2[%c12_32, %c0_33] : memref<14x256xf32, #tpu.memory_space<vmem>>, vector<1x256xf32>
    %c13_34 = arith.constant 13 : index
    %c0_35 = arith.constant 0 : index
    %123 = vector.load %arg2[%c13_34, %c0_35] : memref<14x256xf32, #tpu.memory_space<vmem>>, vector<1x256xf32>
    %cst = arith.constant 0.000000e+00 : f32
    %124 = vector.broadcast %cst : f32 to vector<1x256xf32>
    %cst_36 = arith.constant 0.000000e+00 : f32
    %125 = vector.broadcast %cst_36 : f32 to vector<1x256xf32>
    %c3_i32 = arith.constant 3 : i32
    %126 = tpu.dynamic_rotate %12 by %c3_i32 dim 1 : vector<1x256xf32>, i32 -> vector<1x256xf32>
    %127 = arith.mulf %126, %112 : vector<1x256xf32>
    %c3_i32_37 = arith.constant 3 : i32
    %128 = tpu.dynamic_rotate %13 by %c3_i32_37 dim 1 : vector<1x256xf32>, i32 -> vector<1x256xf32>
    %129 = arith.mulf %128, %112 : vector<1x256xf32>
    %130 = vector.broadcast %14 : f32 to vector<1x256xf32>
    %131 = arith.mulf %130, %127 : vector<1x256xf32>
    %132 = arith.addf %125, %131 : vector<1x256xf32>
    %133 = vector.broadcast %63 : f32 to vector<1x256xf32>
    %134 = arith.mulf %133, %129 : vector<1x256xf32>
    %135 = arith.addf %132, %134 : vector<1x256xf32>
    %c2_i32 = arith.constant 2 : i32
    %136 = tpu.dynamic_rotate %12 by %c2_i32 dim 1 : vector<1x256xf32>, i32 -> vector<1x256xf32>
    %137 = arith.mulf %136, %113 : vector<1x256xf32>
    %c2_i32_38 = arith.constant 2 : i32
    %138 = tpu.dynamic_rotate %13 by %c2_i32_38 dim 1 : vector<1x256xf32>, i32 -> vector<1x256xf32>
    %139 = arith.mulf %138, %113 : vector<1x256xf32>
    %140 = vector.broadcast %15 : f32 to vector<1x256xf32>
    %141 = arith.mulf %140, %137 : vector<1x256xf32>
    %142 = arith.addf %135, %141 : vector<1x256xf32>
    %143 = vector.broadcast %64 : f32 to vector<1x256xf32>
    %144 = arith.mulf %143, %139 : vector<1x256xf32>
    %145 = arith.addf %142, %144 : vector<1x256xf32>
    %c1_i32 = arith.constant 1 : i32
    %146 = tpu.dynamic_rotate %12 by %c1_i32 dim 1 : vector<1x256xf32>, i32 -> vector<1x256xf32>
    %147 = arith.mulf %146, %114 : vector<1x256xf32>
    %c1_i32_39 = arith.constant 1 : i32
    %148 = tpu.dynamic_rotate %13 by %c1_i32_39 dim 1 : vector<1x256xf32>, i32 -> vector<1x256xf32>
    %149 = arith.mulf %148, %114 : vector<1x256xf32>
    %150 = vector.broadcast %16 : f32 to vector<1x256xf32>
    %151 = arith.mulf %150, %147 : vector<1x256xf32>
    %152 = arith.addf %145, %151 : vector<1x256xf32>
    %153 = vector.broadcast %65 : f32 to vector<1x256xf32>
    %154 = arith.mulf %153, %149 : vector<1x256xf32>
    %155 = arith.addf %152, %154 : vector<1x256xf32>
    %156 = vector.broadcast %17 : f32 to vector<1x256xf32>
    %157 = arith.mulf %156, %12 : vector<1x256xf32>
    %158 = arith.addf %155, %157 : vector<1x256xf32>
    %159 = vector.broadcast %66 : f32 to vector<1x256xf32>
    %160 = arith.mulf %159, %13 : vector<1x256xf32>
    %161 = arith.addf %158, %160 : vector<1x256xf32>
    %c255_i32 = arith.constant 255 : i32
    %162 = tpu.dynamic_rotate %12 by %c255_i32 dim 1 : vector<1x256xf32>, i32 -> vector<1x256xf32>
    %163 = arith.mulf %162, %115 : vector<1x256xf32>
    %c255_i32_40 = arith.constant 255 : i32
    %164 = tpu.dynamic_rotate %13 by %c255_i32_40 dim 1 : vector<1x256xf32>, i32 -> vector<1x256xf32>
    %165 = arith.mulf %164, %115 : vector<1x256xf32>
    %166 = vector.broadcast %18 : f32 to vector<1x256xf32>
    %167 = arith.mulf %166, %163 : vector<1x256xf32>
    %168 = arith.addf %161, %167 : vector<1x256xf32>
    %169 = vector.broadcast %67 : f32 to vector<1x256xf32>
    %170 = arith.mulf %169, %165 : vector<1x256xf32>
    %171 = arith.addf %168, %170 : vector<1x256xf32>
    %c254_i32 = arith.constant 254 : i32
    %172 = tpu.dynamic_rotate %12 by %c254_i32 dim 1 : vector<1x256xf32>, i32 -> vector<1x256xf32>
    %173 = arith.mulf %172, %116 : vector<1x256xf32>
    %c254_i32_41 = arith.constant 254 : i32
    %174 = tpu.dynamic_rotate %13 by %c254_i32_41 dim 1 : vector<1x256xf32>, i32 -> vector<1x256xf32>
    %175 = arith.mulf %174, %116 : vector<1x256xf32>
    %176 = vector.broadcast %19 : f32 to vector<1x256xf32>
    %177 = arith.mulf %176, %173 : vector<1x256xf32>
    %178 = arith.addf %171, %177 : vector<1x256xf32>
    %179 = vector.broadcast %68 : f32 to vector<1x256xf32>
    %180 = arith.mulf %179, %175 : vector<1x256xf32>
    %181 = arith.addf %178, %180 : vector<1x256xf32>
    %c253_i32 = arith.constant 253 : i32
    %182 = tpu.dynamic_rotate %12 by %c253_i32 dim 1 : vector<1x256xf32>, i32 -> vector<1x256xf32>
    %183 = arith.mulf %182, %117 : vector<1x256xf32>
    %c253_i32_42 = arith.constant 253 : i32
    %184 = tpu.dynamic_rotate %13 by %c253_i32_42 dim 1 : vector<1x256xf32>, i32 -> vector<1x256xf32>
    %185 = arith.mulf %184, %117 : vector<1x256xf32>
    %186 = vector.broadcast %20 : f32 to vector<1x256xf32>
    %187 = arith.mulf %186, %183 : vector<1x256xf32>
    %188 = arith.addf %181, %187 : vector<1x256xf32>
    %189 = vector.broadcast %69 : f32 to vector<1x256xf32>
    %190 = arith.mulf %189, %185 : vector<1x256xf32>
    %191 = arith.addf %188, %190 : vector<1x256xf32>
    %c48_i32 = arith.constant 48 : i32
    %192 = tpu.dynamic_rotate %191 by %c48_i32 dim 1 : vector<1x256xf32>, i32 -> vector<1x256xf32>
    %193 = arith.mulf %192, %118 : vector<1x256xf32>
    %194 = arith.addf %124, %193 : vector<1x256xf32>
    %cst_43 = arith.constant 0.000000e+00 : f32
    %195 = vector.broadcast %cst_43 : f32 to vector<1x256xf32>
    %c3_i32_44 = arith.constant 3 : i32
    %196 = tpu.dynamic_rotate %12 by %c3_i32_44 dim 1 : vector<1x256xf32>, i32 -> vector<1x256xf32>
    %197 = arith.mulf %196, %112 : vector<1x256xf32>
    %c3_i32_45 = arith.constant 3 : i32
    %198 = tpu.dynamic_rotate %13 by %c3_i32_45 dim 1 : vector<1x256xf32>, i32 -> vector<1x256xf32>
    %199 = arith.mulf %198, %112 : vector<1x256xf32>
    %200 = vector.broadcast %21 : f32 to vector<1x256xf32>
    %201 = arith.mulf %200, %197 : vector<1x256xf32>
    %202 = arith.addf %195, %201 : vector<1x256xf32>
    %203 = vector.broadcast %70 : f32 to vector<1x256xf32>
    %204 = arith.mulf %203, %199 : vector<1x256xf32>
    %205 = arith.addf %202, %204 : vector<1x256xf32>
    %c2_i32_46 = arith.constant 2 : i32
    %206 = tpu.dynamic_rotate %12 by %c2_i32_46 dim 1 : vector<1x256xf32>, i32 -> vector<1x256xf32>
    %207 = arith.mulf %206, %113 : vector<1x256xf32>
    %c2_i32_47 = arith.constant 2 : i32
    %208 = tpu.dynamic_rotate %13 by %c2_i32_47 dim 1 : vector<1x256xf32>, i32 -> vector<1x256xf32>
    %209 = arith.mulf %208, %113 : vector<1x256xf32>
    %210 = vector.broadcast %22 : f32 to vector<1x256xf32>
    %211 = arith.mulf %210, %207 : vector<1x256xf32>
    %212 = arith.addf %205, %211 : vector<1x256xf32>
    %213 = vector.broadcast %71 : f32 to vector<1x256xf32>
    %214 = arith.mulf %213, %209 : vector<1x256xf32>
    %215 = arith.addf %212, %214 : vector<1x256xf32>
    %c1_i32_48 = arith.constant 1 : i32
    %216 = tpu.dynamic_rotate %12 by %c1_i32_48 dim 1 : vector<1x256xf32>, i32 -> vector<1x256xf32>
    %217 = arith.mulf %216, %114 : vector<1x256xf32>
    %c1_i32_49 = arith.constant 1 : i32
    %218 = tpu.dynamic_rotate %13 by %c1_i32_49 dim 1 : vector<1x256xf32>, i32 -> vector<1x256xf32>
    %219 = arith.mulf %218, %114 : vector<1x256xf32>
    %220 = vector.broadcast %23 : f32 to vector<1x256xf32>
    %221 = arith.mulf %220, %217 : vector<1x256xf32>
    %222 = arith.addf %215, %221 : vector<1x256xf32>
    %223 = vector.broadcast %72 : f32 to vector<1x256xf32>
    %224 = arith.mulf %223, %219 : vector<1x256xf32>
    %225 = arith.addf %222, %224 : vector<1x256xf32>
    %226 = vector.broadcast %24 : f32 to vector<1x256xf32>
    %227 = arith.mulf %226, %12 : vector<1x256xf32>
    %228 = arith.addf %225, %227 : vector<1x256xf32>
    %229 = vector.broadcast %73 : f32 to vector<1x256xf32>
    %230 = arith.mulf %229, %13 : vector<1x256xf32>
    %231 = arith.addf %228, %230 : vector<1x256xf32>
    %c255_i32_50 = arith.constant 255 : i32
    %232 = tpu.dynamic_rotate %12 by %c255_i32_50 dim 1 : vector<1x256xf32>, i32 -> vector<1x256xf32>
    %233 = arith.mulf %232, %115 : vector<1x256xf32>
    %c255_i32_51 = arith.constant 255 : i32
    %234 = tpu.dynamic_rotate %13 by %c255_i32_51 dim 1 : vector<1x256xf32>, i32 -> vector<1x256xf32>
    %235 = arith.mulf %234, %115 : vector<1x256xf32>
    %236 = vector.broadcast %25 : f32 to vector<1x256xf32>
    %237 = arith.mulf %236, %233 : vector<1x256xf32>
    %238 = arith.addf %231, %237 : vector<1x256xf32>
    %239 = vector.broadcast %74 : f32 to vector<1x256xf32>
    %240 = arith.mulf %239, %235 : vector<1x256xf32>
    %241 = arith.addf %238, %240 : vector<1x256xf32>
    %c254_i32_52 = arith.constant 254 : i32
    %242 = tpu.dynamic_rotate %12 by %c254_i32_52 dim 1 : vector<1x256xf32>, i32 -> vector<1x256xf32>
    %243 = arith.mulf %242, %116 : vector<1x256xf32>
    %c254_i32_53 = arith.constant 254 : i32
    %244 = tpu.dynamic_rotate %13 by %c254_i32_53 dim 1 : vector<1x256xf32>, i32 -> vector<1x256xf32>
    %245 = arith.mulf %244, %116 : vector<1x256xf32>
    %246 = vector.broadcast %26 : f32 to vector<1x256xf32>
    %247 = arith.mulf %246, %243 : vector<1x256xf32>
    %248 = arith.addf %241, %247 : vector<1x256xf32>
    %249 = vector.broadcast %75 : f32 to vector<1x256xf32>
    %250 = arith.mulf %249, %245 : vector<1x256xf32>
    %251 = arith.addf %248, %250 : vector<1x256xf32>
    %c253_i32_54 = arith.constant 253 : i32
    %252 = tpu.dynamic_rotate %12 by %c253_i32_54 dim 1 : vector<1x256xf32>, i32 -> vector<1x256xf32>
    %253 = arith.mulf %252, %117 : vector<1x256xf32>
    %c253_i32_55 = arith.constant 253 : i32
    %254 = tpu.dynamic_rotate %13 by %c253_i32_55 dim 1 : vector<1x256xf32>, i32 -> vector<1x256xf32>
    %255 = arith.mulf %254, %117 : vector<1x256xf32>
    %256 = vector.broadcast %27 : f32 to vector<1x256xf32>
    %257 = arith.mulf %256, %253 : vector<1x256xf32>
    %258 = arith.addf %251, %257 : vector<1x256xf32>
    %259 = vector.broadcast %76 : f32 to vector<1x256xf32>
    %260 = arith.mulf %259, %255 : vector<1x256xf32>
    %261 = arith.addf %258, %260 : vector<1x256xf32>
    %c32_i32 = arith.constant 32 : i32
    %262 = tpu.dynamic_rotate %261 by %c32_i32 dim 1 : vector<1x256xf32>, i32 -> vector<1x256xf32>
    %263 = arith.mulf %262, %119 : vector<1x256xf32>
    %264 = arith.addf %194, %263 : vector<1x256xf32>
    %cst_56 = arith.constant 0.000000e+00 : f32
    %265 = vector.broadcast %cst_56 : f32 to vector<1x256xf32>
    %c3_i32_57 = arith.constant 3 : i32
    %266 = tpu.dynamic_rotate %12 by %c3_i32_57 dim 1 : vector<1x256xf32>, i32 -> vector<1x256xf32>
    %267 = arith.mulf %266, %112 : vector<1x256xf32>
    %c3_i32_58 = arith.constant 3 : i32
    %268 = tpu.dynamic_rotate %13 by %c3_i32_58 dim 1 : vector<1x256xf32>, i32 -> vector<1x256xf32>
    %269 = arith.mulf %268, %112 : vector<1x256xf32>
    %270 = vector.broadcast %28 : f32 to vector<1x256xf32>
    %271 = arith.mulf %270, %267 : vector<1x256xf32>
    %272 = arith.addf %265, %271 : vector<1x256xf32>
    %273 = vector.broadcast %77 : f32 to vector<1x256xf32>
    %274 = arith.mulf %273, %269 : vector<1x256xf32>
    %275 = arith.addf %272, %274 : vector<1x256xf32>
    %c2_i32_59 = arith.constant 2 : i32
    %276 = tpu.dynamic_rotate %12 by %c2_i32_59 dim 1 : vector<1x256xf32>, i32 -> vector<1x256xf32>
    %277 = arith.mulf %276, %113 : vector<1x256xf32>
    %c2_i32_60 = arith.constant 2 : i32
    %278 = tpu.dynamic_rotate %13 by %c2_i32_60 dim 1 : vector<1x256xf32>, i32 -> vector<1x256xf32>
    %279 = arith.mulf %278, %113 : vector<1x256xf32>
    %280 = vector.broadcast %29 : f32 to vector<1x256xf32>
    %281 = arith.mulf %280, %277 : vector<1x256xf32>
    %282 = arith.addf %275, %281 : vector<1x256xf32>
    %283 = vector.broadcast %78 : f32 to vector<1x256xf32>
    %284 = arith.mulf %283, %279 : vector<1x256xf32>
    %285 = arith.addf %282, %284 : vector<1x256xf32>
    %c1_i32_61 = arith.constant 1 : i32
    %286 = tpu.dynamic_rotate %12 by %c1_i32_61 dim 1 : vector<1x256xf32>, i32 -> vector<1x256xf32>
    %287 = arith.mulf %286, %114 : vector<1x256xf32>
    %c1_i32_62 = arith.constant 1 : i32
    %288 = tpu.dynamic_rotate %13 by %c1_i32_62 dim 1 : vector<1x256xf32>, i32 -> vector<1x256xf32>
    %289 = arith.mulf %288, %114 : vector<1x256xf32>
    %290 = vector.broadcast %30 : f32 to vector<1x256xf32>
    %291 = arith.mulf %290, %287 : vector<1x256xf32>
    %292 = arith.addf %285, %291 : vector<1x256xf32>
    %293 = vector.broadcast %79 : f32 to vector<1x256xf32>
    %294 = arith.mulf %293, %289 : vector<1x256xf32>
    %295 = arith.addf %292, %294 : vector<1x256xf32>
    %296 = vector.broadcast %31 : f32 to vector<1x256xf32>
    %297 = arith.mulf %296, %12 : vector<1x256xf32>
    %298 = arith.addf %295, %297 : vector<1x256xf32>
    %299 = vector.broadcast %80 : f32 to vector<1x256xf32>
    %300 = arith.mulf %299, %13 : vector<1x256xf32>
    %301 = arith.addf %298, %300 : vector<1x256xf32>
    %c255_i32_63 = arith.constant 255 : i32
    %302 = tpu.dynamic_rotate %12 by %c255_i32_63 dim 1 : vector<1x256xf32>, i32 -> vector<1x256xf32>
    %303 = arith.mulf %302, %115 : vector<1x256xf32>
    %c255_i32_64 = arith.constant 255 : i32
    %304 = tpu.dynamic_rotate %13 by %c255_i32_64 dim 1 : vector<1x256xf32>, i32 -> vector<1x256xf32>
    %305 = arith.mulf %304, %115 : vector<1x256xf32>
    %306 = vector.broadcast %32 : f32 to vector<1x256xf32>
    %307 = arith.mulf %306, %303 : vector<1x256xf32>
    %308 = arith.addf %301, %307 : vector<1x256xf32>
    %309 = vector.broadcast %81 : f32 to vector<1x256xf32>
    %310 = arith.mulf %309, %305 : vector<1x256xf32>
    %311 = arith.addf %308, %310 : vector<1x256xf32>
    %c254_i32_65 = arith.constant 254 : i32
    %312 = tpu.dynamic_rotate %12 by %c254_i32_65 dim 1 : vector<1x256xf32>, i32 -> vector<1x256xf32>
    %313 = arith.mulf %312, %116 : vector<1x256xf32>
    %c254_i32_66 = arith.constant 254 : i32
    %314 = tpu.dynamic_rotate %13 by %c254_i32_66 dim 1 : vector<1x256xf32>, i32 -> vector<1x256xf32>
    %315 = arith.mulf %314, %116 : vector<1x256xf32>
    %316 = vector.broadcast %33 : f32 to vector<1x256xf32>
    %317 = arith.mulf %316, %313 : vector<1x256xf32>
    %318 = arith.addf %311, %317 : vector<1x256xf32>
    %319 = vector.broadcast %82 : f32 to vector<1x256xf32>
    %320 = arith.mulf %319, %315 : vector<1x256xf32>
    %321 = arith.addf %318, %320 : vector<1x256xf32>
    %c253_i32_67 = arith.constant 253 : i32
    %322 = tpu.dynamic_rotate %12 by %c253_i32_67 dim 1 : vector<1x256xf32>, i32 -> vector<1x256xf32>
    %323 = arith.mulf %322, %117 : vector<1x256xf32>
    %c253_i32_68 = arith.constant 253 : i32
    %324 = tpu.dynamic_rotate %13 by %c253_i32_68 dim 1 : vector<1x256xf32>, i32 -> vector<1x256xf32>
    %325 = arith.mulf %324, %117 : vector<1x256xf32>
    %326 = vector.broadcast %34 : f32 to vector<1x256xf32>
    %327 = arith.mulf %326, %323 : vector<1x256xf32>
    %328 = arith.addf %321, %327 : vector<1x256xf32>
    %329 = vector.broadcast %83 : f32 to vector<1x256xf32>
    %330 = arith.mulf %329, %325 : vector<1x256xf32>
    %331 = arith.addf %328, %330 : vector<1x256xf32>
    %c16_i32 = arith.constant 16 : i32
    %332 = tpu.dynamic_rotate %331 by %c16_i32 dim 1 : vector<1x256xf32>, i32 -> vector<1x256xf32>
    %333 = arith.mulf %332, %120 : vector<1x256xf32>
    %334 = arith.addf %264, %333 : vector<1x256xf32>
    %cst_69 = arith.constant 0.000000e+00 : f32
    %335 = vector.broadcast %cst_69 : f32 to vector<1x256xf32>
    %c3_i32_70 = arith.constant 3 : i32
    %336 = tpu.dynamic_rotate %12 by %c3_i32_70 dim 1 : vector<1x256xf32>, i32 -> vector<1x256xf32>
    %337 = arith.mulf %336, %112 : vector<1x256xf32>
    %c3_i32_71 = arith.constant 3 : i32
    %338 = tpu.dynamic_rotate %13 by %c3_i32_71 dim 1 : vector<1x256xf32>, i32 -> vector<1x256xf32>
    %339 = arith.mulf %338, %112 : vector<1x256xf32>
    %340 = vector.broadcast %35 : f32 to vector<1x256xf32>
    %341 = arith.mulf %340, %337 : vector<1x256xf32>
    %342 = arith.addf %335, %341 : vector<1x256xf32>
    %343 = vector.broadcast %84 : f32 to vector<1x256xf32>
    %344 = arith.mulf %343, %339 : vector<1x256xf32>
    %345 = arith.addf %342, %344 : vector<1x256xf32>
    %c2_i32_72 = arith.constant 2 : i32
    %346 = tpu.dynamic_rotate %12 by %c2_i32_72 dim 1 : vector<1x256xf32>, i32 -> vector<1x256xf32>
    %347 = arith.mulf %346, %113 : vector<1x256xf32>
    %c2_i32_73 = arith.constant 2 : i32
    %348 = tpu.dynamic_rotate %13 by %c2_i32_73 dim 1 : vector<1x256xf32>, i32 -> vector<1x256xf32>
    %349 = arith.mulf %348, %113 : vector<1x256xf32>
    %350 = vector.broadcast %36 : f32 to vector<1x256xf32>
    %351 = arith.mulf %350, %347 : vector<1x256xf32>
    %352 = arith.addf %345, %351 : vector<1x256xf32>
    %353 = vector.broadcast %85 : f32 to vector<1x256xf32>
    %354 = arith.mulf %353, %349 : vector<1x256xf32>
    %355 = arith.addf %352, %354 : vector<1x256xf32>
    %c1_i32_74 = arith.constant 1 : i32
    %356 = tpu.dynamic_rotate %12 by %c1_i32_74 dim 1 : vector<1x256xf32>, i32 -> vector<1x256xf32>
    %357 = arith.mulf %356, %114 : vector<1x256xf32>
    %c1_i32_75 = arith.constant 1 : i32
    %358 = tpu.dynamic_rotate %13 by %c1_i32_75 dim 1 : vector<1x256xf32>, i32 -> vector<1x256xf32>
    %359 = arith.mulf %358, %114 : vector<1x256xf32>
    %360 = vector.broadcast %37 : f32 to vector<1x256xf32>
    %361 = arith.mulf %360, %357 : vector<1x256xf32>
    %362 = arith.addf %355, %361 : vector<1x256xf32>
    %363 = vector.broadcast %86 : f32 to vector<1x256xf32>
    %364 = arith.mulf %363, %359 : vector<1x256xf32>
    %365 = arith.addf %362, %364 : vector<1x256xf32>
    %366 = vector.broadcast %38 : f32 to vector<1x256xf32>
    %367 = arith.mulf %366, %12 : vector<1x256xf32>
    %368 = arith.addf %365, %367 : vector<1x256xf32>
    %369 = vector.broadcast %87 : f32 to vector<1x256xf32>
    %370 = arith.mulf %369, %13 : vector<1x256xf32>
    %371 = arith.addf %368, %370 : vector<1x256xf32>
    %c255_i32_76 = arith.constant 255 : i32
    %372 = tpu.dynamic_rotate %12 by %c255_i32_76 dim 1 : vector<1x256xf32>, i32 -> vector<1x256xf32>
    %373 = arith.mulf %372, %115 : vector<1x256xf32>
    %c255_i32_77 = arith.constant 255 : i32
    %374 = tpu.dynamic_rotate %13 by %c255_i32_77 dim 1 : vector<1x256xf32>, i32 -> vector<1x256xf32>
    %375 = arith.mulf %374, %115 : vector<1x256xf32>
    %376 = vector.broadcast %39 : f32 to vector<1x256xf32>
    %377 = arith.mulf %376, %373 : vector<1x256xf32>
    %378 = arith.addf %371, %377 : vector<1x256xf32>
    %379 = vector.broadcast %88 : f32 to vector<1x256xf32>
    %380 = arith.mulf %379, %375 : vector<1x256xf32>
    %381 = arith.addf %378, %380 : vector<1x256xf32>
    %c254_i32_78 = arith.constant 254 : i32
    %382 = tpu.dynamic_rotate %12 by %c254_i32_78 dim 1 : vector<1x256xf32>, i32 -> vector<1x256xf32>
    %383 = arith.mulf %382, %116 : vector<1x256xf32>
    %c254_i32_79 = arith.constant 254 : i32
    %384 = tpu.dynamic_rotate %13 by %c254_i32_79 dim 1 : vector<1x256xf32>, i32 -> vector<1x256xf32>
    %385 = arith.mulf %384, %116 : vector<1x256xf32>
    %386 = vector.broadcast %40 : f32 to vector<1x256xf32>
    %387 = arith.mulf %386, %383 : vector<1x256xf32>
    %388 = arith.addf %381, %387 : vector<1x256xf32>
    %389 = vector.broadcast %89 : f32 to vector<1x256xf32>
    %390 = arith.mulf %389, %385 : vector<1x256xf32>
    %391 = arith.addf %388, %390 : vector<1x256xf32>
    %c253_i32_80 = arith.constant 253 : i32
    %392 = tpu.dynamic_rotate %12 by %c253_i32_80 dim 1 : vector<1x256xf32>, i32 -> vector<1x256xf32>
    %393 = arith.mulf %392, %117 : vector<1x256xf32>
    %c253_i32_81 = arith.constant 253 : i32
    %394 = tpu.dynamic_rotate %13 by %c253_i32_81 dim 1 : vector<1x256xf32>, i32 -> vector<1x256xf32>
    %395 = arith.mulf %394, %117 : vector<1x256xf32>
    %396 = vector.broadcast %41 : f32 to vector<1x256xf32>
    %397 = arith.mulf %396, %393 : vector<1x256xf32>
    %398 = arith.addf %391, %397 : vector<1x256xf32>
    %399 = vector.broadcast %90 : f32 to vector<1x256xf32>
    %400 = arith.mulf %399, %395 : vector<1x256xf32>
    %401 = arith.addf %398, %400 : vector<1x256xf32>
    %402 = arith.addf %334, %401 : vector<1x256xf32>
    %cst_82 = arith.constant 0.000000e+00 : f32
    %403 = vector.broadcast %cst_82 : f32 to vector<1x256xf32>
    %c3_i32_83 = arith.constant 3 : i32
    %404 = tpu.dynamic_rotate %12 by %c3_i32_83 dim 1 : vector<1x256xf32>, i32 -> vector<1x256xf32>
    %405 = arith.mulf %404, %112 : vector<1x256xf32>
    %c3_i32_84 = arith.constant 3 : i32
    %406 = tpu.dynamic_rotate %13 by %c3_i32_84 dim 1 : vector<1x256xf32>, i32 -> vector<1x256xf32>
    %407 = arith.mulf %406, %112 : vector<1x256xf32>
    %408 = vector.broadcast %42 : f32 to vector<1x256xf32>
    %409 = arith.mulf %408, %405 : vector<1x256xf32>
    %410 = arith.addf %403, %409 : vector<1x256xf32>
    %411 = vector.broadcast %91 : f32 to vector<1x256xf32>
    %412 = arith.mulf %411, %407 : vector<1x256xf32>
    %413 = arith.addf %410, %412 : vector<1x256xf32>
    %c2_i32_85 = arith.constant 2 : i32
    %414 = tpu.dynamic_rotate %12 by %c2_i32_85 dim 1 : vector<1x256xf32>, i32 -> vector<1x256xf32>
    %415 = arith.mulf %414, %113 : vector<1x256xf32>
    %c2_i32_86 = arith.constant 2 : i32
    %416 = tpu.dynamic_rotate %13 by %c2_i32_86 dim 1 : vector<1x256xf32>, i32 -> vector<1x256xf32>
    %417 = arith.mulf %416, %113 : vector<1x256xf32>
    %418 = vector.broadcast %43 : f32 to vector<1x256xf32>
    %419 = arith.mulf %418, %415 : vector<1x256xf32>
    %420 = arith.addf %413, %419 : vector<1x256xf32>
    %421 = vector.broadcast %92 : f32 to vector<1x256xf32>
    %422 = arith.mulf %421, %417 : vector<1x256xf32>
    %423 = arith.addf %420, %422 : vector<1x256xf32>
    %c1_i32_87 = arith.constant 1 : i32
    %424 = tpu.dynamic_rotate %12 by %c1_i32_87 dim 1 : vector<1x256xf32>, i32 -> vector<1x256xf32>
    %425 = arith.mulf %424, %114 : vector<1x256xf32>
    %c1_i32_88 = arith.constant 1 : i32
    %426 = tpu.dynamic_rotate %13 by %c1_i32_88 dim 1 : vector<1x256xf32>, i32 -> vector<1x256xf32>
    %427 = arith.mulf %426, %114 : vector<1x256xf32>
    %428 = vector.broadcast %44 : f32 to vector<1x256xf32>
    %429 = arith.mulf %428, %425 : vector<1x256xf32>
    %430 = arith.addf %423, %429 : vector<1x256xf32>
    %431 = vector.broadcast %93 : f32 to vector<1x256xf32>
    %432 = arith.mulf %431, %427 : vector<1x256xf32>
    %433 = arith.addf %430, %432 : vector<1x256xf32>
    %434 = vector.broadcast %45 : f32 to vector<1x256xf32>
    %435 = arith.mulf %434, %12 : vector<1x256xf32>
    %436 = arith.addf %433, %435 : vector<1x256xf32>
    %437 = vector.broadcast %94 : f32 to vector<1x256xf32>
    %438 = arith.mulf %437, %13 : vector<1x256xf32>
    %439 = arith.addf %436, %438 : vector<1x256xf32>
    %c255_i32_89 = arith.constant 255 : i32
    %440 = tpu.dynamic_rotate %12 by %c255_i32_89 dim 1 : vector<1x256xf32>, i32 -> vector<1x256xf32>
    %441 = arith.mulf %440, %115 : vector<1x256xf32>
    %c255_i32_90 = arith.constant 255 : i32
    %442 = tpu.dynamic_rotate %13 by %c255_i32_90 dim 1 : vector<1x256xf32>, i32 -> vector<1x256xf32>
    %443 = arith.mulf %442, %115 : vector<1x256xf32>
    %444 = vector.broadcast %46 : f32 to vector<1x256xf32>
    %445 = arith.mulf %444, %441 : vector<1x256xf32>
    %446 = arith.addf %439, %445 : vector<1x256xf32>
    %447 = vector.broadcast %95 : f32 to vector<1x256xf32>
    %448 = arith.mulf %447, %443 : vector<1x256xf32>
    %449 = arith.addf %446, %448 : vector<1x256xf32>
    %c254_i32_91 = arith.constant 254 : i32
    %450 = tpu.dynamic_rotate %12 by %c254_i32_91 dim 1 : vector<1x256xf32>, i32 -> vector<1x256xf32>
    %451 = arith.mulf %450, %116 : vector<1x256xf32>
    %c254_i32_92 = arith.constant 254 : i32
    %452 = tpu.dynamic_rotate %13 by %c254_i32_92 dim 1 : vector<1x256xf32>, i32 -> vector<1x256xf32>
    %453 = arith.mulf %452, %116 : vector<1x256xf32>
    %454 = vector.broadcast %47 : f32 to vector<1x256xf32>
    %455 = arith.mulf %454, %451 : vector<1x256xf32>
    %456 = arith.addf %449, %455 : vector<1x256xf32>
    %457 = vector.broadcast %96 : f32 to vector<1x256xf32>
    %458 = arith.mulf %457, %453 : vector<1x256xf32>
    %459 = arith.addf %456, %458 : vector<1x256xf32>
    %c253_i32_93 = arith.constant 253 : i32
    %460 = tpu.dynamic_rotate %12 by %c253_i32_93 dim 1 : vector<1x256xf32>, i32 -> vector<1x256xf32>
    %461 = arith.mulf %460, %117 : vector<1x256xf32>
    %c253_i32_94 = arith.constant 253 : i32
    %462 = tpu.dynamic_rotate %13 by %c253_i32_94 dim 1 : vector<1x256xf32>, i32 -> vector<1x256xf32>
    %463 = arith.mulf %462, %117 : vector<1x256xf32>
    %464 = vector.broadcast %48 : f32 to vector<1x256xf32>
    %465 = arith.mulf %464, %461 : vector<1x256xf32>
    %466 = arith.addf %459, %465 : vector<1x256xf32>
    %467 = vector.broadcast %97 : f32 to vector<1x256xf32>
    %468 = arith.mulf %467, %463 : vector<1x256xf32>
    %469 = arith.addf %466, %468 : vector<1x256xf32>
    %c240_i32 = arith.constant 240 : i32
    %470 = tpu.dynamic_rotate %469 by %c240_i32 dim 1 : vector<1x256xf32>, i32 -> vector<1x256xf32>
    %471 = arith.mulf %470, %121 : vector<1x256xf32>
    %472 = arith.addf %402, %471 : vector<1x256xf32>
    %cst_95 = arith.constant 0.000000e+00 : f32
    %473 = vector.broadcast %cst_95 : f32 to vector<1x256xf32>
    %c3_i32_96 = arith.constant 3 : i32
    %474 = tpu.dynamic_rotate %12 by %c3_i32_96 dim 1 : vector<1x256xf32>, i32 -> vector<1x256xf32>
    %475 = arith.mulf %474, %112 : vector<1x256xf32>
    %c3_i32_97 = arith.constant 3 : i32
    %476 = tpu.dynamic_rotate %13 by %c3_i32_97 dim 1 : vector<1x256xf32>, i32 -> vector<1x256xf32>
    %477 = arith.mulf %476, %112 : vector<1x256xf32>
    %478 = vector.broadcast %49 : f32 to vector<1x256xf32>
    %479 = arith.mulf %478, %475 : vector<1x256xf32>
    %480 = arith.addf %473, %479 : vector<1x256xf32>
    %481 = vector.broadcast %98 : f32 to vector<1x256xf32>
    %482 = arith.mulf %481, %477 : vector<1x256xf32>
    %483 = arith.addf %480, %482 : vector<1x256xf32>
    %c2_i32_98 = arith.constant 2 : i32
    %484 = tpu.dynamic_rotate %12 by %c2_i32_98 dim 1 : vector<1x256xf32>, i32 -> vector<1x256xf32>
    %485 = arith.mulf %484, %113 : vector<1x256xf32>
    %c2_i32_99 = arith.constant 2 : i32
    %486 = tpu.dynamic_rotate %13 by %c2_i32_99 dim 1 : vector<1x256xf32>, i32 -> vector<1x256xf32>
    %487 = arith.mulf %486, %113 : vector<1x256xf32>
    %488 = vector.broadcast %50 : f32 to vector<1x256xf32>
    %489 = arith.mulf %488, %485 : vector<1x256xf32>
    %490 = arith.addf %483, %489 : vector<1x256xf32>
    %491 = vector.broadcast %99 : f32 to vector<1x256xf32>
    %492 = arith.mulf %491, %487 : vector<1x256xf32>
    %493 = arith.addf %490, %492 : vector<1x256xf32>
    %c1_i32_100 = arith.constant 1 : i32
    %494 = tpu.dynamic_rotate %12 by %c1_i32_100 dim 1 : vector<1x256xf32>, i32 -> vector<1x256xf32>
    %495 = arith.mulf %494, %114 : vector<1x256xf32>
    %c1_i32_101 = arith.constant 1 : i32
    %496 = tpu.dynamic_rotate %13 by %c1_i32_101 dim 1 : vector<1x256xf32>, i32 -> vector<1x256xf32>
    %497 = arith.mulf %496, %114 : vector<1x256xf32>
    %498 = vector.broadcast %51 : f32 to vector<1x256xf32>
    %499 = arith.mulf %498, %495 : vector<1x256xf32>
    %500 = arith.addf %493, %499 : vector<1x256xf32>
    %501 = vector.broadcast %100 : f32 to vector<1x256xf32>
    %502 = arith.mulf %501, %497 : vector<1x256xf32>
    %503 = arith.addf %500, %502 : vector<1x256xf32>
    %504 = vector.broadcast %52 : f32 to vector<1x256xf32>
    %505 = arith.mulf %504, %12 : vector<1x256xf32>
    %506 = arith.addf %503, %505 : vector<1x256xf32>
    %507 = vector.broadcast %101 : f32 to vector<1x256xf32>
    %508 = arith.mulf %507, %13 : vector<1x256xf32>
    %509 = arith.addf %506, %508 : vector<1x256xf32>
    %c255_i32_102 = arith.constant 255 : i32
    %510 = tpu.dynamic_rotate %12 by %c255_i32_102 dim 1 : vector<1x256xf32>, i32 -> vector<1x256xf32>
    %511 = arith.mulf %510, %115 : vector<1x256xf32>
    %c255_i32_103 = arith.constant 255 : i32
    %512 = tpu.dynamic_rotate %13 by %c255_i32_103 dim 1 : vector<1x256xf32>, i32 -> vector<1x256xf32>
    %513 = arith.mulf %512, %115 : vector<1x256xf32>
    %514 = vector.broadcast %53 : f32 to vector<1x256xf32>
    %515 = arith.mulf %514, %511 : vector<1x256xf32>
    %516 = arith.addf %509, %515 : vector<1x256xf32>
    %517 = vector.broadcast %102 : f32 to vector<1x256xf32>
    %518 = arith.mulf %517, %513 : vector<1x256xf32>
    %519 = arith.addf %516, %518 : vector<1x256xf32>
    %c254_i32_104 = arith.constant 254 : i32
    %520 = tpu.dynamic_rotate %12 by %c254_i32_104 dim 1 : vector<1x256xf32>, i32 -> vector<1x256xf32>
    %521 = arith.mulf %520, %116 : vector<1x256xf32>
    %c254_i32_105 = arith.constant 254 : i32
    %522 = tpu.dynamic_rotate %13 by %c254_i32_105 dim 1 : vector<1x256xf32>, i32 -> vector<1x256xf32>
    %523 = arith.mulf %522, %116 : vector<1x256xf32>
    %524 = vector.broadcast %54 : f32 to vector<1x256xf32>
    %525 = arith.mulf %524, %521 : vector<1x256xf32>
    %526 = arith.addf %519, %525 : vector<1x256xf32>
    %527 = vector.broadcast %103 : f32 to vector<1x256xf32>
    %528 = arith.mulf %527, %523 : vector<1x256xf32>
    %529 = arith.addf %526, %528 : vector<1x256xf32>
    %c253_i32_106 = arith.constant 253 : i32
    %530 = tpu.dynamic_rotate %12 by %c253_i32_106 dim 1 : vector<1x256xf32>, i32 -> vector<1x256xf32>
    %531 = arith.mulf %530, %117 : vector<1x256xf32>
    %c253_i32_107 = arith.constant 253 : i32
    %532 = tpu.dynamic_rotate %13 by %c253_i32_107 dim 1 : vector<1x256xf32>, i32 -> vector<1x256xf32>
    %533 = arith.mulf %532, %117 : vector<1x256xf32>
    %534 = vector.broadcast %55 : f32 to vector<1x256xf32>
    %535 = arith.mulf %534, %531 : vector<1x256xf32>
    %536 = arith.addf %529, %535 : vector<1x256xf32>
    %537 = vector.broadcast %104 : f32 to vector<1x256xf32>
    %538 = arith.mulf %537, %533 : vector<1x256xf32>
    %539 = arith.addf %536, %538 : vector<1x256xf32>
    %c224_i32 = arith.constant 224 : i32
    %540 = tpu.dynamic_rotate %539 by %c224_i32 dim 1 : vector<1x256xf32>, i32 -> vector<1x256xf32>
    %541 = arith.mulf %540, %122 : vector<1x256xf32>
    %542 = arith.addf %472, %541 : vector<1x256xf32>
    %cst_108 = arith.constant 0.000000e+00 : f32
    %543 = vector.broadcast %cst_108 : f32 to vector<1x256xf32>
    %c3_i32_109 = arith.constant 3 : i32
    %544 = tpu.dynamic_rotate %12 by %c3_i32_109 dim 1 : vector<1x256xf32>, i32 -> vector<1x256xf32>
    %545 = arith.mulf %544, %112 : vector<1x256xf32>
    %c3_i32_110 = arith.constant 3 : i32
    %546 = tpu.dynamic_rotate %13 by %c3_i32_110 dim 1 : vector<1x256xf32>, i32 -> vector<1x256xf32>
    %547 = arith.mulf %546, %112 : vector<1x256xf32>
    %548 = vector.broadcast %56 : f32 to vector<1x256xf32>
    %549 = arith.mulf %548, %545 : vector<1x256xf32>
    %550 = arith.addf %543, %549 : vector<1x256xf32>
    %551 = vector.broadcast %105 : f32 to vector<1x256xf32>
    %552 = arith.mulf %551, %547 : vector<1x256xf32>
    %553 = arith.addf %550, %552 : vector<1x256xf32>
    %c2_i32_111 = arith.constant 2 : i32
    %554 = tpu.dynamic_rotate %12 by %c2_i32_111 dim 1 : vector<1x256xf32>, i32 -> vector<1x256xf32>
    %555 = arith.mulf %554, %113 : vector<1x256xf32>
    %c2_i32_112 = arith.constant 2 : i32
    %556 = tpu.dynamic_rotate %13 by %c2_i32_112 dim 1 : vector<1x256xf32>, i32 -> vector<1x256xf32>
    %557 = arith.mulf %556, %113 : vector<1x256xf32>
    %558 = vector.broadcast %57 : f32 to vector<1x256xf32>
    %559 = arith.mulf %558, %555 : vector<1x256xf32>
    %560 = arith.addf %553, %559 : vector<1x256xf32>
    %561 = vector.broadcast %106 : f32 to vector<1x256xf32>
    %562 = arith.mulf %561, %557 : vector<1x256xf32>
    %563 = arith.addf %560, %562 : vector<1x256xf32>
    %c1_i32_113 = arith.constant 1 : i32
    %564 = tpu.dynamic_rotate %12 by %c1_i32_113 dim 1 : vector<1x256xf32>, i32 -> vector<1x256xf32>
    %565 = arith.mulf %564, %114 : vector<1x256xf32>
    %c1_i32_114 = arith.constant 1 : i32
    %566 = tpu.dynamic_rotate %13 by %c1_i32_114 dim 1 : vector<1x256xf32>, i32 -> vector<1x256xf32>
    %567 = arith.mulf %566, %114 : vector<1x256xf32>
    %568 = vector.broadcast %58 : f32 to vector<1x256xf32>
    %569 = arith.mulf %568, %565 : vector<1x256xf32>
    %570 = arith.addf %563, %569 : vector<1x256xf32>
    %571 = vector.broadcast %107 : f32 to vector<1x256xf32>
    %572 = arith.mulf %571, %567 : vector<1x256xf32>
    %573 = arith.addf %570, %572 : vector<1x256xf32>
    %574 = vector.broadcast %59 : f32 to vector<1x256xf32>
    %575 = arith.mulf %574, %12 : vector<1x256xf32>
    %576 = arith.addf %573, %575 : vector<1x256xf32>
    %577 = vector.broadcast %108 : f32 to vector<1x256xf32>
    %578 = arith.mulf %577, %13 : vector<1x256xf32>
    %579 = arith.addf %576, %578 : vector<1x256xf32>
    %c255_i32_115 = arith.constant 255 : i32
    %580 = tpu.dynamic_rotate %12 by %c255_i32_115 dim 1 : vector<1x256xf32>, i32 -> vector<1x256xf32>
    %581 = arith.mulf %580, %115 : vector<1x256xf32>
    %c255_i32_116 = arith.constant 255 : i32
    %582 = tpu.dynamic_rotate %13 by %c255_i32_116 dim 1 : vector<1x256xf32>, i32 -> vector<1x256xf32>
    %583 = arith.mulf %582, %115 : vector<1x256xf32>
    %584 = vector.broadcast %60 : f32 to vector<1x256xf32>
    %585 = arith.mulf %584, %581 : vector<1x256xf32>
    %586 = arith.addf %579, %585 : vector<1x256xf32>
    %587 = vector.broadcast %109 : f32 to vector<1x256xf32>
    %588 = arith.mulf %587, %583 : vector<1x256xf32>
    %589 = arith.addf %586, %588 : vector<1x256xf32>
    %c254_i32_117 = arith.constant 254 : i32
    %590 = tpu.dynamic_rotate %12 by %c254_i32_117 dim 1 : vector<1x256xf32>, i32 -> vector<1x256xf32>
    %591 = arith.mulf %590, %116 : vector<1x256xf32>
    %c254_i32_118 = arith.constant 254 : i32
    %592 = tpu.dynamic_rotate %13 by %c254_i32_118 dim 1 : vector<1x256xf32>, i32 -> vector<1x256xf32>
    %593 = arith.mulf %592, %116 : vector<1x256xf32>
    %594 = vector.broadcast %61 : f32 to vector<1x256xf32>
    %595 = arith.mulf %594, %591 : vector<1x256xf32>
    %596 = arith.addf %589, %595 : vector<1x256xf32>
    %597 = vector.broadcast %110 : f32 to vector<1x256xf32>
    %598 = arith.mulf %597, %593 : vector<1x256xf32>
    %599 = arith.addf %596, %598 : vector<1x256xf32>
    %c253_i32_119 = arith.constant 253 : i32
    %600 = tpu.dynamic_rotate %12 by %c253_i32_119 dim 1 : vector<1x256xf32>, i32 -> vector<1x256xf32>
    %601 = arith.mulf %600, %117 : vector<1x256xf32>
    %c253_i32_120 = arith.constant 253 : i32
    %602 = tpu.dynamic_rotate %13 by %c253_i32_120 dim 1 : vector<1x256xf32>, i32 -> vector<1x256xf32>
    %603 = arith.mulf %602, %117 : vector<1x256xf32>
    %604 = vector.broadcast %62 : f32 to vector<1x256xf32>
    %605 = arith.mulf %604, %601 : vector<1x256xf32>
    %606 = arith.addf %599, %605 : vector<1x256xf32>
    %607 = vector.broadcast %111 : f32 to vector<1x256xf32>
    %608 = arith.mulf %607, %603 : vector<1x256xf32>
    %609 = arith.addf %606, %608 : vector<1x256xf32>
    %c208_i32 = arith.constant 208 : i32
    %610 = tpu.dynamic_rotate %609 by %c208_i32 dim 1 : vector<1x256xf32>, i32 -> vector<1x256xf32>
    %611 = arith.mulf %610, %123 : vector<1x256xf32>
    %612 = arith.addf %542, %611 : vector<1x256xf32>
    %cst_121 = arith.constant 0.000000e+00 : f32
    %613 = vector.broadcast %cst_121 : f32 to vector<1x256xf32>
    %614 = arith.subf %613, %612 : vector<1x256xf32>
    %615 = math.exp %614 : vector<1x256xf32>
    %cst_122 = arith.constant 1.000000e+00 : f32
    %616 = vector.broadcast %cst_122 : f32 to vector<1x256xf32>
    %617 = arith.addf %616, %615 : vector<1x256xf32>
    %618 = tpu.reciprocal %617 {approx = true} : vector<1x256xf32> -> vector<1x256xf32>
    %c0_123 = arith.constant 0 : index
    %c0_124 = arith.constant 0 : index
    %c0_125 = arith.constant 0 : index
    %619 = vector.load %arg3[%c0_123, %c0_124, %c0_125] : memref<1x4x256xf32, #tpu.memory_space<vmem>>, vector<1x1x256xf32>
    %620 = vector.shape_cast %619 : vector<1x1x256xf32> to vector<1x256xf32>
    %621 = arith.mulf %620, %618 : vector<1x256xf32>
    %c0_126 = arith.constant 0 : index
    %c0_127 = arith.constant 0 : index
    %c0_128 = arith.constant 0 : index
    %622 = vector.load %arg4[%c0_126, %c0_127, %c0_128] : memref<1x4x256xf32, #tpu.memory_space<vmem>>, vector<1x1x256xf32>
    %623 = vector.shape_cast %622 : vector<1x1x256xf32> to vector<1x256xf32>
    %624 = vector.shape_cast %621 : vector<1x256xf32> to vector<1x1x256xf32>
    tpu.vector_store %arg4[%c0_126, %c0_127, %c0_128], %624 {strides = array<i32>} : memref<1x4x256xf32, #tpu.memory_space<vmem>>, vector<1x1x256xf32>,
    %c0_129 = arith.constant 0 : index
    %c1_130 = arith.constant 1 : index
    %c0_131 = arith.constant 0 : index
    %625 = vector.load %arg3[%c0_129, %c1_130, %c0_131] : memref<1x4x256xf32, #tpu.memory_space<vmem>>, vector<1x1x256xf32>
    %626 = vector.shape_cast %625 : vector<1x1x256xf32> to vector<1x256xf32>
    %627 = arith.mulf %626, %618 : vector<1x256xf32>
    %c0_132 = arith.constant 0 : index
    %c1_133 = arith.constant 1 : index
    %c0_134 = arith.constant 0 : index
    %628 = vector.load %arg4[%c0_132, %c1_133, %c0_134] : memref<1x4x256xf32, #tpu.memory_space<vmem>>, vector<1x1x256xf32>
    %629 = vector.shape_cast %628 : vector<1x1x256xf32> to vector<1x256xf32>
    %630 = vector.shape_cast %627 : vector<1x256xf32> to vector<1x1x256xf32>
    tpu.vector_store %arg4[%c0_132, %c1_133, %c0_134], %630 {strides = array<i32>} : memref<1x4x256xf32, #tpu.memory_space<vmem>>, vector<1x1x256xf32>,
    %c0_135 = arith.constant 0 : index
    %c2_136 = arith.constant 2 : index
    %c0_137 = arith.constant 0 : index
    %631 = vector.load %arg3[%c0_135, %c2_136, %c0_137] : memref<1x4x256xf32, #tpu.memory_space<vmem>>, vector<1x1x256xf32>
    %632 = vector.shape_cast %631 : vector<1x1x256xf32> to vector<1x256xf32>
    %633 = arith.mulf %632, %618 : vector<1x256xf32>
    %c0_138 = arith.constant 0 : index
    %c2_139 = arith.constant 2 : index
    %c0_140 = arith.constant 0 : index
    %634 = vector.load %arg4[%c0_138, %c2_139, %c0_140] : memref<1x4x256xf32, #tpu.memory_space<vmem>>, vector<1x1x256xf32>
    %635 = vector.shape_cast %634 : vector<1x1x256xf32> to vector<1x256xf32>
    %636 = vector.shape_cast %633 : vector<1x256xf32> to vector<1x1x256xf32>
    tpu.vector_store %arg4[%c0_138, %c2_139, %c0_140], %636 {strides = array<i32>} : memref<1x4x256xf32, #tpu.memory_space<vmem>>, vector<1x1x256xf32>,
    %c0_141 = arith.constant 0 : index
    %c3_142 = arith.constant 3 : index
    %c0_143 = arith.constant 0 : index
    %637 = vector.load %arg3[%c0_141, %c3_142, %c0_143] : memref<1x4x256xf32, #tpu.memory_space<vmem>>, vector<1x1x256xf32>
    %638 = vector.shape_cast %637 : vector<1x1x256xf32> to vector<1x256xf32>
    %639 = arith.mulf %638, %618 : vector<1x256xf32>
    %c0_144 = arith.constant 0 : index
    %c3_145 = arith.constant 3 : index
    %c0_146 = arith.constant 0 : index
    %640 = vector.load %arg4[%c0_144, %c3_145, %c0_146] : memref<1x4x256xf32, #tpu.memory_space<vmem>>, vector<1x1x256xf32>
    %641 = vector.shape_cast %640 : vector<1x1x256xf32> to vector<1x256xf32>
    %642 = vector.shape_cast %639 : vector<1x256xf32> to vector<1x1x256xf32>
    tpu.vector_store %arg4[%c0_144, %c3_145, %c0_146], %642 {strides = array<i32>} : memref<1x4x256xf32, #tpu.memory_space<vmem>>, vector<1x1x256xf32>,
    return
  }
  func.func @transform_0(%arg0: i32) -> i32 {
    %c0_i32 = arith.constant 0 : i32
    %c0_i32_0 = arith.constant 0 : i32
    return %c0_i32 : i32
  }
  func.func @transform_1(%arg0: i32) -> (i32, i32) {
    %c0_i32 = arith.constant 0 : i32
    %c0_i32_0 = arith.constant 0 : i32
    %c0_i32_1 = arith.constant 0 : i32
    return %c0_i32, %c0_i32_0 : i32, i32
  }
  func.func @transform_2(%arg0: i32) -> (i32, i32, i32) {
    %c0_i32 = arith.constant 0 : i32
    %c0_i32_0 = arith.constant 0 : i32
    %c0_i32_1 = arith.constant 0 : i32
    return %arg0, %c0_i32, %c0_i32_0 : i32, i32, i32
  }
  func.func @transform_3(%arg0: i32) -> (i32, i32, i32) {
    %c0_i32 = arith.constant 0 : i32
    %c0_i32_0 = arith.constant 0 : i32
    %c0_i32_1 = arith.constant 0 : i32
    return %arg0, %c0_i32, %c0_i32_0 : i32, i32, i32
  }
}

</mosaic_0001>

<llo_original>
// kernel: tpu_custom_call.1
$region0: #{tpu_custom_call.1}
  #allocation0 [shape = 'u32[]', space=smem, size = 0x4, offset = 0x4, fixed_abs, tag = 'smem constant byte address 0x4 - core index']
  #allocation1 [shape = 'u32[144,128]{1,0:T(1,128)}', space=vmem, size = 0x12000, scoped, tag = 'internal scratch']
  %s0 = inlined_call_operand.hbm [shape: f32[98], index: 0, kind: input, shape index: {}]
  %s1 = inlined_call_operand.hbm [shape: f32[14,256], index: 1, kind: input, shape index: {}]
  %s2 = inlined_call_operand.hbm [shape: f32[2,4,256], index: 2, kind: input, shape index: {}]
  %s3 = inlined_call_operand.hbm [shape: f32[2,4,256], index: 3, kind: output, shape index: {}]
  %s4 = sld [smem:[#allocation0]]
  $region57: #{tpu_custom_call.1} parent=0
    _
  %s6 = ssub.s32 1, %s4
  %s7 = scalar_select 0, %s6, %s4
  $region1: #{tpu_custom_call.1} parent=0
    #allocation2 [shape = 'u8[512]{0}', space=smem, size = 0x200, scoped, tag = 'input window, operand 0, single buffered']
    #allocation3 [shape = 's32[2]{0}', space=sflag, size = 0x8, scoped, tag = 'scoped memory for tpu_custom_call.1']
    #allocation4 [shape = 's32[2]{0}', space=sflag, size = 0x8, scoped, tag = 'scoped memory for tpu_custom_call.1']
    #allocation5 [shape = 's32[2]{0}', space=sflag, size = 0x8, scoped, tag = 'scoped memory for tpu_custom_call.1']
    #allocation6 [shape = 'u8[16384]{0}', space=vmem, size = 0x4000, scoped, tag = 'input window, operand 1, single buffered']
    #allocation7 [shape = 'u8[8192]{0}', space=vmem, size = 0x2000, scoped, tag = 'input window, operand 2']
    #allocation8 [shape = 's32[2]{0}', space=sflag, size = 0x8, scoped, tag = 'scoped memory for tpu_custom_call.1']
    #allocation9 [shape = 'u8[8192]{0}', space=vmem, size = 0x2000, scoped, tag = 'output window, operand 0']
    %8 = vsyncpa [#allocation5], 0
    %9 = vsyncpa [#allocation3], 0
    %10 = vsyncpa [#allocation8], 0
    %s11 = scalar_lea.sflag [#allocation8], 1
    %12 = vsyncpa %s11, 0
    %13 = vsyncpa [#allocation4], 0
    %s14 = scalar_lea.sflag [#allocation4], 1
    %15 = vsyncpa %s14, 0
    loop: start=0, step=1, limit=4
    $region2: #{tpu_custom_call.1} parent=1 // loop_pre_header
      _
    $region3: #{tpu_custom_call.1} parent=1 // loop_header
      %s17 = sphi 0, %s21
      %p18 = scmp.ge.s32.totalorder %s17, 4
      %s25 = sphi 0, %s25
      %s27 = sphi 0, %s25
      %s28 = sphi 0, %s27
      %s42 = sphi 0, %s28
      %s46 = sphi 0, %s46
      %s48 = sphi 0, %s46
      %s49 = sphi 0, %s48
      %s63 = sphi 0, %s49
      %s69 = sphi 0, %s71
      %s72 = sphi 0, %s69
      %s73 = sphi 0, %s72
      %s89 = sphi 0, %s73
      %s95 = sphi 0, %s97
      %s98 = sphi 0, %s95
      %s99 = sphi 0, %s98
      %s115 = sphi 0, %s99
    $region4: #{tpu_custom_call.1} parent=1 // loop_header_branch
      %20 = sbr.rel (%p18) target = $region8
    $region5: #{tpu_custom_call.1} parent=1 // loop_body
      %s22 = ssub.s32 %s17, 1
      %s23 = ssub.s32 %s17, 2
      %s24 = sadd.s32 %s17, 1
      %s26 = sadd.s32 %s25, 1
      %p29 = scmp.eq.s32.totalorder %s17, 1
      %p30 = scmp.ne.s32.totalorder %s25, %s27
      %p31 = scmp.eq.s32.totalorder %s17, 0
      %p32 = por %p30, %p31
      %p33 = scmp.ne.s32.totalorder %s25, %s27
      %p34 = scmp.eq.s32.totalorder %s22, 1
      %p35 = por %p33, %p34
      %p36 = scmp.ne.s32.totalorder %s27, %s28
      %p37 = scmp.eq.s32.totalorder %s22, 0
      %p38 = por %p36, %p37
      %p39 = scmp.ne.s32.totalorder %s27, %s28
      %p40 = scmp.eq.s32.totalorder %s23, 1
      %p41 = por %p39, %p40
      %p43 = scmp.ne.s32.totalorder %s28, %s42
      %p44 = scmp.eq.s32.totalorder %s23, 0
      %p45 = por %p43, %p44
      %s47 = sadd.s32 %s46, 1
      %p50 = scmp.eq.s32.totalorder %s17, 1
      %p51 = scmp.ne.s32.totalorder %s46, %s48
      %p52 = scmp.eq.s32.totalorder %s17, 0
      %p53 = por %p51, %p52
      %p54 = scmp.ne.s32.totalorder %s46, %s48
      %p55 = scmp.eq.s32.totalorder %s22, 1
      %p56 = por %p54, %p55
      %p57 = scmp.ne.s32.totalorder %s48, %s49
      %p58 = scmp.eq.s32.totalorder %s22, 0
      %p59 = por %p57, %p58
      %p60 = scmp.ne.s32.totalorder %s48, %s49
      %p61 = scmp.eq.s32.totalorder %s23, 1
      %p62 = por %p60, %p61
      %p64 = scmp.ne.s32.totalorder %s49, %s63
      %p65 = scmp.eq.s32.totalorder %s23, 0
      %p66 = por %p64, %p65
      %s67 = ssub.s32 %s17, %s24
      %p68 = scmp.eq.s32.totalorder %s67, 0
      %s70 = sadd.s32 %s69, 1
      %s71 = scalar_select %p68, %s69, %s70
      %p74 = pneg %p68
      %p75 = scmp.eq.s32.totalorder %s17, 1
      %p76 = por %p74, %p75
      %p77 = scmp.ne.s32.totalorder %s69, %s72
      %p78 = scmp.eq.s32.totalorder %s17, 0
      %p79 = por %p77, %p78
      %p80 = scmp.ne.s32.totalorder %s69, %s72
      %p81 = scmp.eq.s32.totalorder %s22, 1
      %p82 = por %p80, %p81
      %p83 = scmp.ne.s32.totalorder %s72, %s73
      %p84 = scmp.eq.s32.totalorder %s22, 0
      %p85 = por %p83, %p84
      %p86 = scmp.ne.s32.totalorder %s72, %s73
      %p87 = scmp.eq.s32.totalorder %s23, 1
      %p88 = por %p86, %p87
      %p90 = scmp.ne.s32.totalorder %s73, %s89
      %p91 = scmp.eq.s32.totalorder %s23, 0
      %p92 = por %p90, %p91
      %s93 = ssub.s32 %s17, %s24
      %p94 = scmp.eq.s32.totalorder %s93, 0
      %s96 = sadd.s32 %s95, 1
      %s97 = scalar_select %p94, %s95, %s96
      %p100 = pneg %p94
      %p101 = scmp.eq.s32.totalorder %s17, 1
      %p102 = por %p100, %p101
      %p103 = scmp.ne.s32.totalorder %s95, %s98
      %p104 = scmp.eq.s32.totalorder %s17, 0
      %p105 = por %p103, %p104
      %p106 = scmp.ne.s32.totalorder %s95, %s98
      %p107 = scmp.eq.s32.totalorder %s22, 1
      %p108 = por %p106, %p107
      %p109 = scmp.ne.s32.totalorder %s98, %s99
      %p110 = scmp.eq.s32.totalorder %s22, 0
      %p111 = por %p109, %p110
      %p112 = scmp.ne.s32.totalorder %s98, %s99
      %p113 = scmp.eq.s32.totalorder %s23, 1
      %p114 = por %p112, %p113
      %p116 = scmp.ne.s32.totalorder %s99, %s115
      %p117 = scmp.eq.s32.totalorder %s23, 0
      %p118 = por %p116, %p117
      %p119 = scmp.le.s32.totalorder 1, %s17
      %p120 = scmp.lt.s32.totalorder %s17, 3
      %p121 = pnand %p119, %p120
      %p122 = pneg %p121
      // Predicated region
      $region9: #{tpu_custom_call.1} parent=5 // pred_check
        _
      $region10: #{tpu_custom_call.1} parent=5 // pred_check_branch
        %124 = sbr.rel (%p121) target = $region12
      $region11: #{tpu_custom_call.1} parent=5 // pred_region
        %s125 = ssub.s32 %s17, 1
        // Predicated region
        $region13: #{tpu_custom_call.1} parent=11 // pred_check
          %p126 = pneg %p38
        $region14: #{tpu_custom_call.1} parent=11 // pred_check_branch
          %128 = sbr.rel (%p126) target = $region16
        $region15: #{tpu_custom_call.1} parent=11 // pred_region
          %s130 = ssub.s32 16, 16
          %131 = vsyncadd [#allocation5], %s130
          %134 = dma.hbm_to_smem %s0, 16, [#allocation2], [#allocation5]
        $region16: #{tpu_custom_call.1} parent=11 // pred_fallthru
          _
        // Predicated region
        $region17: #{tpu_custom_call.1} parent=11 // pred_check
          %p135 = pneg %p59
        $region18: #{tpu_custom_call.1} parent=11 // pred_check_branch
          %137 = sbr.rel (%p135) target = $region20
        $region19: #{tpu_custom_call.1} parent=11 // pred_region
          %s139 = ssub.s32 512, 512
          %140 = vsyncadd [#allocation3], %s139
          %s141 = sshll.u32 [#allocation6], 4
          %s142 = int_to_ptr.vmem [resolvable:$true] %s141
          %147 = dma.hbm_to_vmem [thread:$0]  %s1, 512, %s142, [#allocation3], 256, 256, 16
        $region20: #{tpu_custom_call.1} parent=11 // pred_fallthru
          _
      $region12: #{tpu_custom_call.1} parent=5 // pred_fallthru
        _
      %p148 = scmp.lt.s32.totalorder %s17, 2
      // Predicated region
      $region21: #{tpu_custom_call.1} parent=5 // pred_check
        %p149 = pneg %p148
      $region22: #{tpu_custom_call.1} parent=5 // pred_check_branch
        %151 = sbr.rel (%p149) target = $region24
      $region23: #{tpu_custom_call.1} parent=5 // pred_region
        // Predicated region
        $region25: #{tpu_custom_call.1} parent=23 // pred_check
          %p152 = pneg %p79
        $region26: #{tpu_custom_call.1} parent=23 // pred_check_branch
          %154 = sbr.rel (%p152) target = $region28
        $region27: #{tpu_custom_call.1} parent=23 // pred_region
          %s155 = sand.u32 %s69, 1
          %s156 = scalar_lea.sflag [#allocation8], %s155
          %s157 = sand.u32 %s69, 1
          %s158 = smul.addr %s157, 8
          %s159 = scalar_lea.vmem [#allocation7], %s158
          %s161 = ssub.s32 128, 128
          %162 = vsyncadd %s156, %s161
          %s163 = smul.addr %s17, 2
          %s164 = smul.addr %s163, 64
          %s165 = scalar_lea.hbm %s2, %s164
          %s167 = sshll.u32 %s159, 4
          %s168 = int_to_ptr.vmem [resolvable:$true] %s167
          %170 = dma.hbm_to_vmem [thread:$0]  %s165, 128, %s168, %s156
        $region28: #{tpu_custom_call.1} parent=23 // pred_fallthru
          _
      $region24: #{tpu_custom_call.1} parent=5 // pred_fallthru
        _
      %p171 = scmp.le.s32.totalorder 1, %s17
      %p172 = scmp.lt.s32.totalorder %s17, 3
      %p173 = pnand %p171, %p172
      %p174 = pneg %p173
      // Predicated region
      $region29: #{tpu_custom_call.1} parent=5 // pred_check
        _
      $region30: #{tpu_custom_call.1} parent=5 // pred_check_branch
        %176 = sbr.rel (%p173) target = $region32
      $region31: #{tpu_custom_call.1} parent=5 // pred_region
        %s177 = ssub.s32 %s17, 1
        // Predicated region
        $region33: #{tpu_custom_call.1} parent=31 // pred_check
          %p178 = pneg %p38
        $region34: #{tpu_custom_call.1} parent=31 // pred_check_branch
          %180 = sbr.rel (%p178) target = $region36
        $region35: #{tpu_custom_call.1} parent=31 // pred_region
          %181 = dma.done [#allocation5], 16
        $region36: #{tpu_custom_call.1} parent=31 // pred_fallthru
          _
        // Predicated region
        $region37: #{tpu_custom_call.1} parent=31 // pred_check
          %p182 = pneg %p59
        $region38: #{tpu_custom_call.1} parent=31 // pred_check_branch
          %184 = sbr.rel (%p182) target = $region40
        $region39: #{tpu_custom_call.1} parent=31 // pred_region
          %185 = dma.done [#allocation3], 512
        $region40: #{tpu_custom_call.1} parent=31 // pred_fallthru
          _
        %s186 = sand.u32 %s72, 1
        %s187 = scalar_lea.sflag [#allocation8], %s186
        %s188 = sand.u32 %s72, 1
        %s189 = smul.addr %s188, 8
        %s190 = scalar_lea.vmem [#allocation7], %s189
        // Predicated region
        $region41: #{tpu_custom_call.1} parent=31 // pred_check
          %p191 = pneg %p85
        $region42: #{tpu_custom_call.1} parent=31 // pred_check_branch
          %193 = sbr.rel (%p191) target = $region44
        $region43: #{tpu_custom_call.1} parent=31 // pred_region
          %194 = dma.done %s187, 128
        $region44: #{tpu_custom_call.1} parent=31 // pred_fallthru
          _
        %195 = sfence
        %p196 = pneg %p38
        %p197 = pneg %p35
        %p198 = pneg %p59
        %p199 = pneg %p56
        %s200 = sand.u32 %s72, 1
        %s201 = scalar_lea.sflag [#allocation8], %s200
        %s202 = sand.u32 %s72, 1
        %s203 = smul.addr %s202, 8
        %s204 = scalar_lea.vmem [#allocation7], %s203
        %p205 = pneg %p85
        %p206 = pneg %p82
        %p207 = pneg %p111
        %p208 = pneg %p108
        %s209 = sand.u32 %s98, 1
        %s210 = scalar_lea.sflag [#allocation4], %s209
        %s211 = sand.u32 %s98, 1
        %s212 = smul.addr %s211, 8
        %s213 = scalar_lea.vmem [#allocation9], %s212
        %v214 = vld [vmem:[%s190] ss:$4 sm:$0x3]
        %s215 = scalar_lea.vmem %s190, 1 [#allocation7]
        %v216 = vld [vmem:[%s215] ss:$4 sm:$0x3]
        %v217 = vadd.f32 %v214, %v216
        %v218 = vmax.f32 %v214, %v216
        %s219 = scalar_lea.vmem %s190, 2 [#allocation7]
        %v220 = vld [vmem:[%s219] ss:$4 sm:$0x3]
        %v221 = vadd.f32 %v217, %v220
        %v222 = vmax.f32 %v218, %v220
        %s223 = scalar_lea.vmem %s190, 3 [#allocation7]
        %v224 = vld [vmem:[%s223] ss:$4 sm:$0x3]
        %v225 = vadd.f32 %v221, %v224
        %v226 = vmax.f32 %v222, %v224
        %s227 = sld [smem:[#allocation2]]
        %s228 = sld [smem:[#allocation2 + $0x1]]
        %s229 = sld [smem:[#allocation2 + $0x2]]
        %s230 = sld [smem:[#allocation2 + $0x3]]
        %s231 = sld [smem:[#allocation2 + $0x4]]
        %s232 = sld [smem:[#allocation2 + $0x5]]
        %s233 = sld [smem:[#allocation2 + $0x6]]
        %s234 = sld [smem:[#allocation2 + $0x7]]
        %s235 = sld [smem:[#allocation2 + $0x8]]
        %s236 = sld [smem:[#allocation2 + $0x9]]
        %s237 = sld [smem:[#allocation2 + $0xa]]
        %s238 = sld [smem:[#allocation2 + $0xb]]
        %s239 = sld [smem:[#allocation2 + $0xc]]
        %s240 = sld [smem:[#allocation2 + $0xd]]
        %s241 = sld [smem:[#allocation2 + $0xe]]
        %s242 = sld [smem:[#allocation2 + $0xf]]
        %s243 = sld [smem:[#allocation2 + $0x10]]
        %s244 = sld [smem:[#allocation2 + $0x11]]
        %s245 = sld [smem:[#allocation2 + $0x12]]
        %s246 = sld [smem:[#allocation2 + $0x13]]
        %s247 = sld [smem:[#allocation2 + $0x14]]
        %s248 = sld [smem:[#allocation2 + $0x15]]
        %s249 = sld [smem:[#allocation2 + $0x16]]
        %s250 = sld [smem:[#allocation2 + $0x17]]
        %s251 = sld [smem:[#allocation2 + $0x18]]
        %s252 = sld [smem:[#allocation2 + $0x19]]
        %s253 = sld [smem:[#allocation2 + $0x1a]]
        %s254 = sld [smem:[#allocation2 + $0x1b]]
        %s255 = sld [smem:[#allocation2 + $0x1c]]
        %s256 = sld [smem:[#allocation2 + $0x1d]]
        %s257 = sld [smem:[#allocation2 + $0x1e]]
        %s258 = sld [smem:[#allocation2 + $0x1f]]
        %s259 = sld [smem:[#allocation2 + $0x20]]
        %s260 = sld [smem:[#allocation2 + $0x21]]
        %s261 = sld [smem:[#allocation2 + $0x22]]
        %s262 = sld [smem:[#allocation2 + $0x23]]
        %s263 = sld [smem:[#allocation2 + $0x24]]
        %s264 = sld [smem:[#allocation2 + $0x25]]
        %s265 = sld [smem:[#allocation2 + $0x26]]
        %s266 = sld [smem:[#allocation2 + $0x27]]
        %s267 = sld [smem:[#allocation2 + $0x28]]
        %s268 = sld [smem:[#allocation2 + $0x29]]
        %s269 = sld [smem:[#allocation2 + $0x2a]]
        %s270 = sld [smem:[#allocation2 + $0x2b]]
        %s271 = sld [smem:[#allocation2 + $0x2c]]
        %s272 = sld [smem:[#allocation2 + $0x2d]]
        %s273 = sld [smem:[#allocation2 + $0x2e]]
        %s274 = sld [smem:[#allocation2 + $0x2f]]
        %s275 = sld [smem:[#allocation2 + $0x30]]
        %s276 = sld [smem:[#allocation2 + $0x31]]
        %s277 = sld [smem:[#allocation2 + $0x32]]
        %s278 = sld [smem:[#allocation2 + $0x33]]
        %s279 = sld [smem:[#allocation2 + $0x34]]
        %s280 = sld [smem:[#allocation2 + $0x35]]
        %s281 = sld [smem:[#allocation2 + $0x36]]
        %s282 = sld [smem:[#allocation2 + $0x37]]
        %s283 = sld [smem:[#allocation2 + $0x38]]
        %s284 = sld [smem:[#allocation2 + $0x39]]
        %s285 = sld [smem:[#allocation2 + $0x3a]]
        %s286 = sld [smem:[#allocation2 + $0x3b]]
        %s287 = sld [smem:[#allocation2 + $0x3c]]
        %s288 = sld [smem:[#allocation2 + $0x3d]]
        %s289 = sld [smem:[#allocation2 + $0x3e]]
        %s290 = sld [smem:[#allocation2 + $0x3f]]
        %s291 = sld [smem:[#allocation2 + $0x40]]
        %s292 = sld [smem:[#allocation2 + $0x41]]
        %s293 = sld [smem:[#allocation2 + $0x42]]
        %s294 = sld [smem:[#allocation2 + $0x43]]
        %s295 = sld [smem:[#allocation2 + $0x44]]
        %s296 = sld [smem:[#allocation2 + $0x45]]
        %s297 = sld [smem:[#allocation2 + $0x46]]
        %s298 = sld [smem:[#allocation2 + $0x47]]
        %s299 = sld [smem:[#allocation2 + $0x48]]
        %s300 = sld [smem:[#allocation2 + $0x49]]
        %s301 = sld [smem:[#allocation2 + $0x4a]]
        %s302 = sld [smem:[#allocation2 + $0x4b]]
        %s303 = sld [smem:[#allocation2 + $0x4c]]
        %s304 = sld [smem:[#allocation2 + $0x4d]]
        %s305 = sld [smem:[#allocation2 + $0x4e]]
        %s306 = sld [smem:[#allocation2 + $0x4f]]
        %s307 = sld [smem:[#allocation2 + $0x50]]
        %s308 = sld [smem:[#allocation2 + $0x51]]
        %s309 = sld [smem:[#allocation2 + $0x52]]
        %s310 = sld [smem:[#allocation2 + $0x53]]
        %s311 = sld [smem:[#allocation2 + $0x54]]
        %s312 = sld [smem:[#allocation2 + $0x55]]
        %s313 = sld [smem:[#allocation2 + $0x56]]
        %s314 = sld [smem:[#allocation2 + $0x57]]
        %s315 = sld [smem:[#allocation2 + $0x58]]
        %s316 = sld [smem:[#allocation2 + $0x59]]
        %s317 = sld [smem:[#allocation2 + $0x5a]]
        %s318 = sld [smem:[#allocation2 + $0x5b]]
        %s319 = sld [smem:[#allocation2 + $0x5c]]
        %s320 = sld [smem:[#allocation2 + $0x5d]]
        %s321 = sld [smem:[#allocation2 + $0x5e]]
        %s322 = sld [smem:[#allocation2 + $0x5f]]
        %s323 = sld [smem:[#allocation2 + $0x60]]
        %s324 = sld [smem:[#allocation2 + $0x61]]
        %v325 = vld [vmem:[#allocation6] ss:$8 sm:$0x3]
        %s326 = scalar_lea.vmem [#allocation6], 1
        %v327 = vld [vmem:[%s326] ss:$8 sm:$0x3]
        %s328 = scalar_lea.vmem [#allocation6], 2
        %v329 = vld [vmem:[%s328] ss:$8 sm:$0x3]
        %s330 = scalar_lea.vmem [#allocation6], 4
        %v331 = vld [vmem:[%s330] ss:$8 sm:$0x3]
        %s332 = scalar_lea.vmem [#allocation6], 5
        %v333 = vld [vmem:[%s332] ss:$8 sm:$0x3]
        %s334 = scalar_lea.vmem [#allocation6], 6
        %v335 = vld [vmem:[%s334] ss:$8 sm:$0x3]
        %s336 = scalar_lea.vmem [#allocation6], 7
        %v337 = vld [vmem:[%s336] ss:$8 sm:$0x3]
        %s338 = scalar_lea.vmem [#allocation6], 16
        %v339 = vld [vmem:[%s338] ss:$8 sm:$0x3]
        %s340 = scalar_lea.vmem [#allocation6], 17
        %v341 = vld [vmem:[%s340] ss:$8 sm:$0x3]
        %s342 = scalar_lea.vmem [#allocation6], 19
        %v343 = vld [vmem:[%s342] ss:$8 sm:$0x3]
        %s344 = scalar_lea.vmem [#allocation6], 20
        %v345 = vld [vmem:[%s344] ss:$8 sm:$0x3]
        %s346 = scalar_lea.vmem [#allocation6], 21
        %v347 = vld [vmem:[%s346] ss:$8 sm:$0x3]
        %v349 = vlaneseq
        %v350 = vshrl.u32 %v349, 7
        %v351 = vsub.s32 0, %v350
        %v352 = vrot.slane %v225, %v351
        %v353 = vlaneseq
        %v354 = vshrl.u32 %v353, 7
        %v355 = vsub.s32 1, %v354
        %v356 = vrot.slane %v225, %v355
        %359 = vrot.lane.b32.xlu0 %v352, 3
        %v360 = vpop.permute.xlu0 %359
        %361 = vrot.lane.b32.xlu0 %v356, 3
        %v362 = vpop.permute.xlu0 %361
        %v363 = vlaneseq
        %v364 = vand.u32 %v363, 127
        %vm365 = vcmp.lt.s32.totalorder %v364, 3
        %v366 = vsel %vm365, %v360, %v362
        %v367 = vsel %vm365, %v362, %v360
        %v369 = vlaneseq
        %v370 = vshrl.u32 %v369, 7
        %v371 = vsub.s32 0, %v370
        %v372 = vrot.slane %v325, %v371
        %v373 = vlaneseq
        %v374 = vshrl.u32 %v373, 7
        %v375 = vsub.s32 1, %v374
        %v376 = vrot.slane %v325, %v375
        %v379 = vmul.f32 %v367, %v372
        %v380 = vmul.f32 %v366, %v376
        %v382 = vlaneseq
        %v383 = vshrl.u32 %v382, 7
        %v384 = vsub.s32 0, %v383
        %v385 = vrot.slane %v226, %v384
        %v386 = vlaneseq
        %v387 = vshrl.u32 %v386, 7
        %v388 = vsub.s32 1, %v387
        %v389 = vrot.slane %v226, %v388
        %392 = vrot.lane.b32.xlu0 %v385, 3
        %v393 = vpop.permute.xlu0 %392
        %394 = vrot.lane.b32.xlu0 %v389, 3
        %v395 = vpop.permute.xlu0 %394
        %v396 = vsel %vm365, %v393, %v395
        %v397 = vsel %vm365, %v395, %v393
        %v398 = vmul.f32 %v397, %v372
        %v399 = vmul.f32 %v396, %v376
        %v400 = vstv %s227
        %v401 = vmul.f32 %v400, %v379
        %v402 = vmul.f32 %v400, %v380
        %v403 = vadd.f32 %v401, 0.0
        %v404 = vadd.f32 %v402, 0.0
        %v405 = vstv %s276
        %v406 = vmul.f32 %v405, %v398
        %v407 = vmul.f32 %v405, %v399
        %v408 = vadd.f32 %v403, %v406
        %v409 = vadd.f32 %v404, %v407
        %410 = vrot.lane.b32.xlu0 %v352, 2
        %v411 = vpop.permute.xlu0 %410
        %412 = vrot.lane.b32.xlu0 %v356, 2
        %v413 = vpop.permute.xlu0 %412
        %vm414 = vcmp.lt.s32.totalorder %v364, 2
        %v415 = vsel %vm414, %v411, %v413
        %v416 = vsel %vm414, %v413, %v411
        %v418 = vlaneseq
        %v419 = vshrl.u32 %v418, 7
        %v420 = vsub.s32 0, %v419
        %v421 = vrot.slane %v327, %v420
        %v422 = vlaneseq
        %v423 = vshrl.u32 %v422, 7
        %v424 = vsub.s32 1, %v423
        %v425 = vrot.slane %v327, %v424
        %v428 = vmul.f32 %v416, %v421
        %v429 = vmul.f32 %v415, %v425
        %430 = vrot.lane.b32.xlu0 %v385, 2
        %v431 = vpop.permute.xlu0 %430
        %432 = vrot.lane.b32.xlu0 %v389, 2
        %v433 = vpop.permute.xlu0 %432
        %v434 = vsel %vm414, %v431, %v433
        %v435 = vsel %vm414, %v433, %v431
        %v436 = vmul.f32 %v435, %v421
        %v437 = vmul.f32 %v434, %v425
        %v438 = vstv %s228
        %v439 = vmul.f32 %v438, %v428
        %v440 = vmul.f32 %v438, %v429
        %v441 = vadd.f32 %v408, %v439
        %v442 = vadd.f32 %v409, %v440
        %v443 = vstv %s277
        %v444 = vmul.f32 %v443, %v436
        %v445 = vmul.f32 %v443, %v437
        %v446 = vadd.f32 %v441, %v444
        %v447 = vadd.f32 %v442, %v445
        %448 = vrot.lane.b32.xlu0 %v352, 1
        %v449 = vpop.permute.xlu0 %448
        %450 = vrot.lane.b32.xlu0 %v356, 1
        %v451 = vpop.permute.xlu0 %450
        %vm452 = vcmp.lt.s32.totalorder %v364, 1
        %v453 = vsel %vm452, %v449, %v451
        %v454 = vsel %vm452, %v451, %v449
        %v456 = vlaneseq
        %v457 = vshrl.u32 %v456, 7
        %v458 = vsub.s32 0, %v457
        %v459 = vrot.slane %v329, %v458
        %v460 = vlaneseq
        %v461 = vshrl.u32 %v460, 7
        %v462 = vsub.s32 1, %v461
        %v463 = vrot.slane %v329, %v462
        %v466 = vmul.f32 %v454, %v459
        %v467 = vmul.f32 %v453, %v463
        %468 = vrot.lane.b32.xlu0 %v385, 1
        %v469 = vpop.permute.xlu0 %468
        %470 = vrot.lane.b32.xlu0 %v389, 1
        %v471 = vpop.permute.xlu0 %470
        %v472 = vsel %vm452, %v469, %v471
        %v473 = vsel %vm452, %v471, %v469
        %v474 = vmul.f32 %v473, %v459
        %v475 = vmul.f32 %v472, %v463
        %v476 = vstv %s229
        %v477 = vmul.f32 %v476, %v466
        %v478 = vmul.f32 %v476, %v467
        %v479 = vadd.f32 %v446, %v477
        %v480 = vadd.f32 %v447, %v478
        %v481 = vstv %s278
        %v482 = vmul.f32 %v481, %v474
        %v483 = vmul.f32 %v481, %v475
        %v484 = vadd.f32 %v479, %v482
        %v485 = vadd.f32 %v480, %v483
        %v486 = vstv %s230
        %v487 = vmul.f32 %v486, %v225
        %v489 = vlaneseq
        %v490 = vshrl.u32 %v489, 7
        %v491 = vsub.s32 0, %v490
        %v492 = vrot.slane %v487, %v491
        %v493 = vlaneseq
        %v494 = vshrl.u32 %v493, 7
        %v495 = vsub.s32 1, %v494
        %v496 = vrot.slane %v487, %v495
        %v499 = vadd.f32 %v484, %v492
        %v500 = vadd.f32 %v485, %v496
        %v501 = vstv %s279
        %v502 = vmul.f32 %v501, %v226
        %v504 = vlaneseq
        %v505 = vshrl.u32 %v504, 7
        %v506 = vsub.s32 0, %v505
        %v507 = vrot.slane %v502, %v506
        %v508 = vlaneseq
        %v509 = vshrl.u32 %v508, 7
        %v510 = vsub.s32 1, %v509
        %v511 = vrot.slane %v502, %v510
        %v514 = vadd.f32 %v499, %v507
        %v515 = vadd.f32 %v500, %v511
        %516 = vrot.lane.b32.xlu0 %v352, 127
        %v517 = vpop.permute.xlu0 %516
        %518 = vrot.lane.b32.xlu0 %v356, 127
        %v519 = vpop.permute.xlu0 %518
        %vm520 = vcmp.lt.s32.totalorder %v364, 127
        %v521 = vsel %vm520, %v517, %v519
        %v522 = vsel %vm520, %v519, %v517
        %v524 = vlaneseq
        %v525 = vshrl.u32 %v524, 7
        %v526 = vsub.s32 0, %v525
        %v527 = vrot.slane %v331, %v526
        %v528 = vlaneseq
        %v529 = vshrl.u32 %v528, 7
        %v530 = vsub.s32 1, %v529
        %v531 = vrot.slane %v331, %v530
        %v534 = vmul.f32 %v521, %v527
        %v535 = vmul.f32 %v522, %v531
        %536 = vrot.lane.b32.xlu0 %v385, 127
        %v537 = vpop.permute.xlu0 %536
        %538 = vrot.lane.b32.xlu0 %v389, 127
        %v539 = vpop.permute.xlu0 %538
        %v540 = vsel %vm520, %v537, %v539
        %v541 = vsel %vm520, %v539, %v537
        %v542 = vmul.f32 %v540, %v527
        %v543 = vmul.f32 %v541, %v531
        %v544 = vstv %s231
        %v545 = vmul.f32 %v544, %v534
        %v546 = vmul.f32 %v544, %v535
        %v547 = vadd.f32 %v514, %v545
        %v548 = vadd.f32 %v515, %v546
        %v549 = vstv %s280
        %v550 = vmul.f32 %v549, %v542
        %v551 = vmul.f32 %v549, %v543
        %v552 = vadd.f32 %v547, %v550
        %v553 = vadd.f32 %v548, %v551
        %554 = vrot.lane.b32.xlu0 %v352, 126
        %v555 = vpop.permute.xlu0 %554
        %556 = vrot.lane.b32.xlu0 %v356, 126
        %v557 = vpop.permute.xlu0 %556
        %vm558 = vcmp.lt.s32.totalorder %v364, 126
        %v559 = vsel %vm558, %v555, %v557
        %v560 = vsel %vm558, %v557, %v555
        %v562 = vlaneseq
        %v563 = vshrl.u32 %v562, 7
        %v564 = vsub.s32 0, %v563
        %v565 = vrot.slane %v333, %v564
        %v566 = vlaneseq
        %v567 = vshrl.u32 %v566, 7
        %v568 = vsub.s32 1, %v567
        %v569 = vrot.slane %v333, %v568
        %v572 = vmul.f32 %v559, %v565
        %v573 = vmul.f32 %v560, %v569
        %574 = vrot.lane.b32.xlu0 %v385, 126
        %v575 = vpop.permute.xlu0 %574
        %576 = vrot.lane.b32.xlu0 %v389, 126
        %v577 = vpop.permute.xlu0 %576
        %v578 = vsel %vm558, %v575, %v577
        %v579 = vsel %vm558, %v577, %v575
        %v580 = vmul.f32 %v578, %v565
        %v581 = vmul.f32 %v579, %v569
        %v582 = vstv %s232
        %v583 = vmul.f32 %v582, %v572
        %v584 = vmul.f32 %v582, %v573
        %v585 = vadd.f32 %v552, %v583
        %v586 = vadd.f32 %v553, %v584
        %v587 = vstv %s281
        %v588 = vmul.f32 %v587, %v580
        %v589 = vmul.f32 %v587, %v581
        %v590 = vadd.f32 %v585, %v588
        %v591 = vadd.f32 %v586, %v589
        %592 = vrot.lane.b32.xlu0 %v352, 125
        %v593 = vpop.permute.xlu0 %592
        %594 = vrot.lane.b32.xlu0 %v356, 125
        %v595 = vpop.permute.xlu0 %594
        %vm596 = vcmp.lt.s32.totalorder %v364, 125
        %v597 = vsel %vm596, %v593, %v595
        %v598 = vsel %vm596, %v595, %v593
        %v600 = vlaneseq
        %v601 = vshrl.u32 %v600, 7
        %v602 = vsub.s32 0, %v601
        %v603 = vrot.slane %v335, %v602
        %v604 = vlaneseq
        %v605 = vshrl.u32 %v604, 7
        %v606 = vsub.s32 1, %v605
        %v607 = vrot.slane %v335, %v606
        %v610 = vmul.f32 %v597, %v603
        %v611 = vmul.f32 %v598, %v607
        %612 = vrot.lane.b32.xlu0 %v385, 125
        %v613 = vpop.permute.xlu0 %612
        %614 = vrot.lane.b32.xlu0 %v389, 125
        %v615 = vpop.permute.xlu0 %614
        %v616 = vsel %vm596, %v613, %v615
        %v617 = vsel %vm596, %v615, %v613
        %v618 = vmul.f32 %v616, %v603
        %v619 = vmul.f32 %v617, %v607
        %v620 = vstv %s233
        %v621 = vmul.f32 %v620, %v610
        %v622 = vmul.f32 %v620, %v611
        %v623 = vadd.f32 %v590, %v621
        %v624 = vadd.f32 %v591, %v622
        %v625 = vstv %s282
        %v626 = vmul.f32 %v625, %v618
        %v627 = vmul.f32 %v625, %v619
        %v628 = vadd.f32 %v623, %v626
        %v629 = vadd.f32 %v624, %v627
        %630 = vrot.lane.b32.xlu0 %v628, 48
        %v631 = vpop.permute.xlu0 %630
        %632 = vrot.lane.b32.xlu0 %v629, 48
        %v633 = vpop.permute.xlu0 %632
        %vm634 = vcmp.lt.s32.totalorder %v364, 48
        %v635 = vsel %vm634, %v631, %v633
        %v636 = vsel %vm634, %v633, %v631
        %v638 = vlaneseq
        %v639 = vshrl.u32 %v638, 7
        %v640 = vsub.s32 0, %v639
        %v641 = vrot.slane %v337, %v640
        %v642 = vlaneseq
        %v643 = vshrl.u32 %v642, 7
        %v644 = vsub.s32 1, %v643
        %v645 = vrot.slane %v337, %v644
        %v648 = vmul.f32 %v636, %v641
        %v649 = vmul.f32 %v635, %v645
        %v650 = vadd.f32 %v648, 0.0
        %v651 = vadd.f32 %v649, 0.0
        %v652 = vstv %s234
        %v653 = vmul.f32 %v652, %v379
        %v654 = vmul.f32 %v652, %v380
        %v655 = vadd.f32 %v653, 0.0
        %v656 = vadd.f32 %v654, 0.0
        %v657 = vstv %s283
        %v658 = vmul.f32 %v657, %v398
        %v659 = vmul.f32 %v657, %v399
        %v660 = vadd.f32 %v655, %v658
        %v661 = vadd.f32 %v656, %v659
        %v662 = vstv %s235
        %v663 = vmul.f32 %v662, %v428
        %v664 = vmul.f32 %v662, %v429
        %v665 = vadd.f32 %v660, %v663
        %v666 = vadd.f32 %v661, %v664
        %v667 = vstv %s284
        %v668 = vmul.f32 %v667, %v436
        %v669 = vmul.f32 %v667, %v437
        %v670 = vadd.f32 %v665, %v668
        %v671 = vadd.f32 %v666, %v669
        %v672 = vstv %s236
        %v673 = vmul.f32 %v672, %v466
        %v674 = vmul.f32 %v672, %v467
        %v675 = vadd.f32 %v670, %v673
        %v676 = vadd.f32 %v671, %v674
        %v677 = vstv %s285
        %v678 = vmul.f32 %v677, %v474
        %v679 = vmul.f32 %v677, %v475
        %v680 = vadd.f32 %v675, %v678
        %v681 = vadd.f32 %v676, %v679
        %v682 = vstv %s237
        %v683 = vmul.f32 %v682, %v225
        %v685 = vlaneseq
        %v686 = vshrl.u32 %v685, 7
        %v687 = vsub.s32 0, %v686
        %v688 = vrot.slane %v683, %v687
        %v689 = vlaneseq
        %v690 = vshrl.u32 %v689, 7
        %v691 = vsub.s32 1, %v690
        %v692 = vrot.slane %v683, %v691
        %v695 = vadd.f32 %v680, %v688
        %v696 = vadd.f32 %v681, %v692
        %v697 = vstv %s286
        %v698 = vmul.f32 %v697, %v226
        %v700 = vlaneseq
        %v701 = vshrl.u32 %v700, 7
        %v702 = vsub.s32 0, %v701
        %v703 = vrot.slane %v698, %v702
        %v704 = vlaneseq
        %v705 = vshrl.u32 %v704, 7
        %v706 = vsub.s32 1, %v705
        %v707 = vrot.slane %v698, %v706
        %v710 = vadd.f32 %v695, %v703
        %v711 = vadd.f32 %v696, %v707
        %v712 = vstv %s238
        %v713 = vmul.f32 %v712, %v534
        %v714 = vmul.f32 %v712, %v535
        %v715 = vadd.f32 %v710, %v713
        %v716 = vadd.f32 %v711, %v714
        %v717 = vstv %s287
        %v718 = vmul.f32 %v717, %v542
        %v719 = vmul.f32 %v717, %v543
        %v720 = vadd.f32 %v715, %v718
        %v721 = vadd.f32 %v716, %v719
        %v722 = vstv %s239
        %v723 = vmul.f32 %v722, %v572
        %v724 = vmul.f32 %v722, %v573
        %v725 = vadd.f32 %v720, %v723
        %v726 = vadd.f32 %v721, %v724
        %v727 = vstv %s288
        %v728 = vmul.f32 %v727, %v580
        %v729 = vmul.f32 %v727, %v581
        %v730 = vadd.f32 %v725, %v728
        %v731 = vadd.f32 %v726, %v729
        %v732 = vstv %s240
        %v733 = vmul.f32 %v732, %v610
        %v734 = vmul.f32 %v732, %v611
        %v735 = vadd.f32 %v730, %v733
        %v736 = vadd.f32 %v731, %v734
        %v737 = vstv %s289
        %v738 = vmul.f32 %v737, %v618
        %v739 = vmul.f32 %v737, %v619
        %v740 = vadd.f32 %v735, %v738
        %v741 = vadd.f32 %v736, %v739
        %742 = vrot.lane.b32.xlu0 %v740, 32
        %v743 = vpop.permute.xlu0 %742
        %744 = vrot.lane.b32.xlu0 %v741, 32
        %v745 = vpop.permute.xlu0 %744
        %vm746 = vcmp.lt.s32.totalorder %v364, 32
        %v747 = vsel %vm746, %v743, %v745
        %v748 = vsel %vm746, %v745, %v743
        %v750 = vlaneseq
        %v751 = vshrl.u32 %v750, 7
        %v752 = vsub.s32 0, %v751
        %v753 = vrot.slane %v339, %v752
        %v754 = vlaneseq
        %v755 = vshrl.u32 %v754, 7
        %v756 = vsub.s32 1, %v755
        %v757 = vrot.slane %v339, %v756
        %v760 = vmul.f32 %v748, %v753
        %v761 = vmul.f32 %v747, %v757
        %v762 = vadd.f32 %v650, %v760
        %v763 = vadd.f32 %v651, %v761
        %v764 = vstv %s241
        %v765 = vmul.f32 %v764, %v379
        %v766 = vmul.f32 %v764, %v380
        %v767 = vadd.f32 %v765, 0.0
        %v768 = vadd.f32 %v766, 0.0
        %v769 = vstv %s290
        %v770 = vmul.f32 %v769, %v398
        %v771 = vmul.f32 %v769, %v399
        %v772 = vadd.f32 %v767, %v770
        %v773 = vadd.f32 %v768, %v771
        %v774 = vstv %s242
        %v775 = vmul.f32 %v774, %v428
        %v776 = vmul.f32 %v774, %v429
        %v777 = vadd.f32 %v772, %v775
        %v778 = vadd.f32 %v773, %v776
        %v779 = vstv %s291
        %v780 = vmul.f32 %v779, %v436
        %v781 = vmul.f32 %v779, %v437
        %v782 = vadd.f32 %v777, %v780
        %v783 = vadd.f32 %v778, %v781
        %v784 = vstv %s243
        %v785 = vmul.f32 %v784, %v466
        %v786 = vmul.f32 %v784, %v467
        %v787 = vadd.f32 %v782, %v785
        %v788 = vadd.f32 %v783, %v786
        %v789 = vstv %s292
        %v790 = vmul.f32 %v789, %v474
        %v791 = vmul.f32 %v789, %v475
        %v792 = vadd.f32 %v787, %v790
        %v793 = vadd.f32 %v788, %v791
        %v794 = vstv %s244
        %v795 = vmul.f32 %v794, %v225
        %v797 = vlaneseq
        %v798 = vshrl.u32 %v797, 7
        %v799 = vsub.s32 0, %v798
        %v800 = vrot.slane %v795, %v799
        %v801 = vlaneseq
        %v802 = vshrl.u32 %v801, 7
        %v803 = vsub.s32 1, %v802
        %v804 = vrot.slane %v795, %v803
        %v807 = vadd.f32 %v792, %v800
        %v808 = vadd.f32 %v793, %v804
        %v809 = vstv %s293
        %v810 = vmul.f32 %v809, %v226
        %v812 = vlaneseq
        %v813 = vshrl.u32 %v812, 7
        %v814 = vsub.s32 0, %v813
        %v815 = vrot.slane %v810, %v814
        %v816 = vlaneseq
        %v817 = vshrl.u32 %v816, 7
        %v818 = vsub.s32 1, %v817
        %v819 = vrot.slane %v810, %v818
        %v822 = vadd.f32 %v807, %v815
        %v823 = vadd.f32 %v808, %v819
        %v824 = vstv %s245
        %v825 = vmul.f32 %v824, %v534
        %v826 = vmul.f32 %v824, %v535
        %v827 = vadd.f32 %v822, %v825
        %v828 = vadd.f32 %v823, %v826
        %v829 = vstv %s294
        %v830 = vmul.f32 %v829, %v542
        %v831 = vmul.f32 %v829, %v543
        %v832 = vadd.f32 %v827, %v830
        %v833 = vadd.f32 %v828, %v831
        %v834 = vstv %s246
        %v835 = vmul.f32 %v834, %v572
        %v836 = vmul.f32 %v834, %v573
        %v837 = vadd.f32 %v832, %v835
        %v838 = vadd.f32 %v833, %v836
        %v839 = vstv %s295
        %v840 = vmul.f32 %v839, %v580
        %v841 = vmul.f32 %v839, %v581
        %v842 = vadd.f32 %v837, %v840
        %v843 = vadd.f32 %v838, %v841
        %v844 = vstv %s247
        %v845 = vmul.f32 %v844, %v610
        %v846 = vmul.f32 %v844, %v611
        %v847 = vadd.f32 %v842, %v845
        %v848 = vadd.f32 %v843, %v846
        %v849 = vstv %s296
        %v850 = vmul.f32 %v849, %v618
        %v851 = vmul.f32 %v849, %v619
        %v852 = vadd.f32 %v847, %v850
        %v853 = vadd.f32 %v848, %v851
        %854 = vrot.lane.b32.xlu0 %v852, 16
        %v855 = vpop.permute.xlu0 %854
        %856 = vrot.lane.b32.xlu0 %v853, 16
        %v857 = vpop.permute.xlu0 %856
        %vm858 = vcmp.lt.s32.totalorder %v364, 16
        %v859 = vsel %vm858, %v855, %v857
        %v860 = vsel %vm858, %v857, %v855
        %v862 = vlaneseq
        %v863 = vshrl.u32 %v862, 7
        %v864 = vsub.s32 0, %v863
        %v865 = vrot.slane %v341, %v864
        %v866 = vlaneseq
        %v867 = vshrl.u32 %v866, 7
        %v868 = vsub.s32 1, %v867
        %v869 = vrot.slane %v341, %v868
        %v872 = vmul.f32 %v860, %v865
        %v873 = vmul.f32 %v859, %v869
        %v874 = vadd.f32 %v762, %v872
        %v875 = vadd.f32 %v763, %v873
        %v876 = vstv %s248
        %v877 = vmul.f32 %v876, %v379
        %v878 = vmul.f32 %v876, %v380
        %v879 = vadd.f32 %v877, 0.0
        %v880 = vadd.f32 %v878, 0.0
        %v881 = vstv %s297
        %v882 = vmul.f32 %v881, %v398
        %v883 = vmul.f32 %v881, %v399
        %v884 = vadd.f32 %v879, %v882
        %v885 = vadd.f32 %v880, %v883
        %v886 = vstv %s249
        %v887 = vmul.f32 %v886, %v428
        %v888 = vmul.f32 %v886, %v429
        %v889 = vadd.f32 %v884, %v887
        %v890 = vadd.f32 %v885, %v888
        %v891 = vstv %s298
        %v892 = vmul.f32 %v891, %v436
        %v893 = vmul.f32 %v891, %v437
        %v894 = vadd.f32 %v889, %v892
        %v895 = vadd.f32 %v890, %v893
        %v896 = vstv %s250
        %v897 = vmul.f32 %v896, %v466
        %v898 = vmul.f32 %v896, %v467
        %v899 = vadd.f32 %v894, %v897
        %v900 = vadd.f32 %v895, %v898
        %v901 = vstv %s299
        %v902 = vmul.f32 %v901, %v474
        %v903 = vmul.f32 %v901, %v475
        %v904 = vadd.f32 %v899, %v902
        %v905 = vadd.f32 %v900, %v903
        %v906 = vstv %s251
        %v907 = vmul.f32 %v906, %v225
        %v909 = vlaneseq
        %v910 = vshrl.u32 %v909, 7
        %v911 = vsub.s32 0, %v910
        %v912 = vrot.slane %v907, %v911
        %v913 = vlaneseq
        %v914 = vshrl.u32 %v913, 7
        %v915 = vsub.s32 1, %v914
        %v916 = vrot.slane %v907, %v915
        %v919 = vadd.f32 %v904, %v912
        %v920 = vadd.f32 %v905, %v916
        %v921 = vstv %s300
        %v922 = vmul.f32 %v921, %v226
        %v924 = vlaneseq
        %v925 = vshrl.u32 %v924, 7
        %v926 = vsub.s32 0, %v925
        %v927 = vrot.slane %v922, %v926
        %v928 = vlaneseq
        %v929 = vshrl.u32 %v928, 7
        %v930 = vsub.s32 1, %v929
        %v931 = vrot.slane %v922, %v930
        %v934 = vadd.f32 %v919, %v927
        %v935 = vadd.f32 %v920, %v931
        %v936 = vstv %s252
        %v937 = vmul.f32 %v936, %v534
        %v938 = vmul.f32 %v936, %v535
        %v939 = vadd.f32 %v934, %v937
        %v940 = vadd.f32 %v935, %v938
        %v941 = vstv %s301
        %v942 = vmul.f32 %v941, %v542
        %v943 = vmul.f32 %v941, %v543
        %v944 = vadd.f32 %v939, %v942
        %v945 = vadd.f32 %v940, %v943
        %v946 = vstv %s253
        %v947 = vmul.f32 %v946, %v572
        %v948 = vmul.f32 %v946, %v573
        %v949 = vadd.f32 %v944, %v947
        %v950 = vadd.f32 %v945, %v948
        %v951 = vstv %s302
        %v952 = vmul.f32 %v951, %v580
        %v953 = vmul.f32 %v951, %v581
        %v954 = vadd.f32 %v949, %v952
        %v955 = vadd.f32 %v950, %v953
        %v956 = vstv %s254
        %v957 = vmul.f32 %v956, %v610
        %v958 = vmul.f32 %v956, %v611
        %v959 = vadd.f32 %v954, %v957
        %v960 = vadd.f32 %v955, %v958
        %v961 = vstv %s303
        %v962 = vmul.f32 %v961, %v618
        %v963 = vmul.f32 %v961, %v619
        %v964 = vadd.f32 %v959, %v962
        %v965 = vadd.f32 %v960, %v963
        %v966 = vadd.f32 %v874, %v964
        %v967 = vadd.f32 %v875, %v965
        %v968 = vstv %s255
        %v969 = vmul.f32 %v968, %v379
        %v970 = vmul.f32 %v968, %v380
        %v971 = vadd.f32 %v969, 0.0
        %v972 = vadd.f32 %v970, 0.0
        %v973 = vstv %s304
        %v974 = vmul.f32 %v973, %v398
        %v975 = vmul.f32 %v973, %v399
        %v976 = vadd.f32 %v971, %v974
        %v977 = vadd.f32 %v972, %v975
        %v978 = vstv %s256
        %v979 = vmul.f32 %v978, %v428
        %v980 = vmul.f32 %v978, %v429
        %v981 = vadd.f32 %v976, %v979
        %v982 = vadd.f32 %v977, %v980
        %v983 = vstv %s305
        %v984 = vmul.f32 %v983, %v436
        %v985 = vmul.f32 %v983, %v437
        %v986 = vadd.f32 %v981, %v984
        %v987 = vadd.f32 %v982, %v985
        %v988 = vstv %s257
        %v989 = vmul.f32 %v988, %v466
        %v990 = vmul.f32 %v988, %v467
        %v991 = vadd.f32 %v986, %v989
        %v992 = vadd.f32 %v987, %v990
        %v993 = vstv %s306
        %v994 = vmul.f32 %v993, %v474
        %v995 = vmul.f32 %v993, %v475
        %v996 = vadd.f32 %v991, %v994
        %v997 = vadd.f32 %v992, %v995
        %v998 = vstv %s258
        %v999 = vmul.f32 %v998, %v225
        %v1001 = vlaneseq
        %v1002 = vshrl.u32 %v1001, 7
        %v1003 = vsub.s32 0, %v1002
        %v1004 = vrot.slane %v999, %v1003
        %v1005 = vlaneseq
        %v1006 = vshrl.u32 %v1005, 7
        %v1007 = vsub.s32 1, %v1006
        %v1008 = vrot.slane %v999, %v1007
        %v1011 = vadd.f32 %v996, %v1004
        %v1012 = vadd.f32 %v997, %v1008
        %v1013 = vstv %s307
        %v1014 = vmul.f32 %v1013, %v226
        %v1016 = vlaneseq
        %v1017 = vshrl.u32 %v1016, 7
        %v1018 = vsub.s32 0, %v1017
        %v1019 = vrot.slane %v1014, %v1018
        %v1020 = vlaneseq
        %v1021 = vshrl.u32 %v1020, 7
        %v1022 = vsub.s32 1, %v1021
        %v1023 = vrot.slane %v1014, %v1022
        %v1026 = vadd.f32 %v1011, %v1019
        %v1027 = vadd.f32 %v1012, %v1023
        %v1028 = vstv %s259
        %v1029 = vmul.f32 %v1028, %v534
        %v1030 = vmul.f32 %v1028, %v535
        %v1031 = vadd.f32 %v1026, %v1029
        %v1032 = vadd.f32 %v1027, %v1030
        %v1033 = vstv %s308
        %v1034 = vmul.f32 %v1033, %v542
        %v1035 = vmul.f32 %v1033, %v543
        %v1036 = vadd.f32 %v1031, %v1034
        %v1037 = vadd.f32 %v1032, %v1035
        %v1038 = vstv %s260
        %v1039 = vmul.f32 %v1038, %v572
        %v1040 = vmul.f32 %v1038, %v573
        %v1041 = vadd.f32 %v1036, %v1039
        %v1042 = vadd.f32 %v1037, %v1040
        %v1043 = vstv %s309
        %v1044 = vmul.f32 %v1043, %v580
        %v1045 = vmul.f32 %v1043, %v581
        %v1046 = vadd.f32 %v1041, %v1044
        %v1047 = vadd.f32 %v1042, %v1045
        %v1048 = vstv %s261
        %v1049 = vmul.f32 %v1048, %v610
        %v1050 = vmul.f32 %v1048, %v611
        %v1051 = vadd.f32 %v1046, %v1049
        %v1052 = vadd.f32 %v1047, %v1050
        %v1053 = vstv %s310
        %v1054 = vmul.f32 %v1053, %v618
        %v1055 = vmul.f32 %v1053, %v619
        %v1056 = vadd.f32 %v1051, %v1054
        %v1057 = vadd.f32 %v1052, %v1055
        %1058 = vrot.lane.b32.xlu0 %v1056, 112
        %v1059 = vpop.permute.xlu0 %1058
        %1060 = vrot.lane.b32.xlu0 %v1057, 112
        %v1061 = vpop.permute.xlu0 %1060
        %vm1062 = vcmp.lt.s32.totalorder %v364, 112
        %v1063 = vsel %vm1062, %v1059, %v1061
        %v1064 = vsel %vm1062, %v1061, %v1059
        %v1066 = vlaneseq
        %v1067 = vshrl.u32 %v1066, 7
        %v1068 = vsub.s32 0, %v1067
        %v1069 = vrot.slane %v343, %v1068
        %v1070 = vlaneseq
        %v1071 = vshrl.u32 %v1070, 7
        %v1072 = vsub.s32 1, %v1071
        %v1073 = vrot.slane %v343, %v1072
        %v1076 = vmul.f32 %v1063, %v1069
        %v1077 = vmul.f32 %v1064, %v1073
        %v1078 = vadd.f32 %v966, %v1076
        %v1079 = vadd.f32 %v967, %v1077
        %v1080 = vstv %s262
        %v1081 = vmul.f32 %v1080, %v379
        %v1082 = vmul.f32 %v1080, %v380
        %v1083 = vadd.f32 %v1081, 0.0
        %v1084 = vadd.f32 %v1082, 0.0
        %v1085 = vstv %s311
        %v1086 = vmul.f32 %v1085, %v398
        %v1087 = vmul.f32 %v1085, %v399
        %v1088 = vadd.f32 %v1083, %v1086
        %v1089 = vadd.f32 %v1084, %v1087
        %v1090 = vstv %s263
        %v1091 = vmul.f32 %v1090, %v428
        %v1092 = vmul.f32 %v1090, %v429
        %v1093 = vadd.f32 %v1088, %v1091
        %v1094 = vadd.f32 %v1089, %v1092
        %v1095 = vstv %s312
        %v1096 = vmul.f32 %v1095, %v436
        %v1097 = vmul.f32 %v1095, %v437
        %v1098 = vadd.f32 %v1093, %v1096
        %v1099 = vadd.f32 %v1094, %v1097
        %v1100 = vstv %s264
        %v1101 = vmul.f32 %v1100, %v466
        %v1102 = vmul.f32 %v1100, %v467
        %v1103 = vadd.f32 %v1098, %v1101
        %v1104 = vadd.f32 %v1099, %v1102
        %v1105 = vstv %s313
        %v1106 = vmul.f32 %v1105, %v474
        %v1107 = vmul.f32 %v1105, %v475
        %v1108 = vadd.f32 %v1103, %v1106
        %v1109 = vadd.f32 %v1104, %v1107
        %v1110 = vstv %s265
        %v1111 = vmul.f32 %v1110, %v225
        %v1113 = vlaneseq
        %v1114 = vshrl.u32 %v1113, 7
        %v1115 = vsub.s32 0, %v1114
        %v1116 = vrot.slane %v1111, %v1115
        %v1117 = vlaneseq
        %v1118 = vshrl.u32 %v1117, 7
        %v1119 = vsub.s32 1, %v1118
        %v1120 = vrot.slane %v1111, %v1119
        %v1123 = vadd.f32 %v1108, %v1116
        %v1124 = vadd.f32 %v1109, %v1120
        %v1125 = vstv %s314
        %v1126 = vmul.f32 %v1125, %v226
        %v1128 = vlaneseq
        %v1129 = vshrl.u32 %v1128, 7
        %v1130 = vsub.s32 0, %v1129
        %v1131 = vrot.slane %v1126, %v1130
        %v1132 = vlaneseq
        %v1133 = vshrl.u32 %v1132, 7
        %v1134 = vsub.s32 1, %v1133
        %v1135 = vrot.slane %v1126, %v1134
        %v1138 = vadd.f32 %v1123, %v1131
        %v1139 = vadd.f32 %v1124, %v1135
        %v1140 = vstv %s266
        %v1141 = vmul.f32 %v1140, %v534
        %v1142 = vmul.f32 %v1140, %v535
        %v1143 = vadd.f32 %v1138, %v1141
        %v1144 = vadd.f32 %v1139, %v1142
        %v1145 = vstv %s315
        %v1146 = vmul.f32 %v1145, %v542
        %v1147 = vmul.f32 %v1145, %v543
        %v1148 = vadd.f32 %v1143, %v1146
        %v1149 = vadd.f32 %v1144, %v1147
        %v1150 = vstv %s267
        %v1151 = vmul.f32 %v1150, %v572
        %v1152 = vmul.f32 %v1150, %v573
        %v1153 = vadd.f32 %v1148, %v1151
        %v1154 = vadd.f32 %v1149, %v1152
        %v1155 = vstv %s316
        %v1156 = vmul.f32 %v1155, %v580
        %v1157 = vmul.f32 %v1155, %v581
        %v1158 = vadd.f32 %v1153, %v1156
        %v1159 = vadd.f32 %v1154, %v1157
        %v1160 = vstv %s268
        %v1161 = vmul.f32 %v1160, %v610
        %v1162 = vmul.f32 %v1160, %v611
        %v1163 = vadd.f32 %v1158, %v1161
        %v1164 = vadd.f32 %v1159, %v1162
        %v1165 = vstv %s317
        %v1166 = vmul.f32 %v1165, %v618
        %v1167 = vmul.f32 %v1165, %v619
        %v1168 = vadd.f32 %v1163, %v1166
        %v1169 = vadd.f32 %v1164, %v1167
        %1170 = vrot.lane.b32.xlu0 %v1168, 96
        %v1171 = vpop.permute.xlu0 %1170
        %1172 = vrot.lane.b32.xlu0 %v1169, 96
        %v1173 = vpop.permute.xlu0 %1172
        %vm1174 = vcmp.lt.s32.totalorder %v364, 96
        %v1175 = vsel %vm1174, %v1171, %v1173
        %v1176 = vsel %vm1174, %v1173, %v1171
        %v1178 = vlaneseq
        %v1179 = vshrl.u32 %v1178, 7
        %v1180 = vsub.s32 0, %v1179
        %v1181 = vrot.slane %v345, %v1180
        %v1182 = vlaneseq
        %v1183 = vshrl.u32 %v1182, 7
        %v1184 = vsub.s32 1, %v1183
        %v1185 = vrot.slane %v345, %v1184
        %v1188 = vmul.f32 %v1175, %v1181
        %v1189 = vmul.f32 %v1176, %v1185
        %v1190 = vadd.f32 %v1078, %v1188
        %v1191 = vadd.f32 %v1079, %v1189
        %v1192 = vstv %s269
        %v1193 = vmul.f32 %v1192, %v379
        %v1194 = vmul.f32 %v1192, %v380
        %v1195 = vadd.f32 %v1193, 0.0
        %v1196 = vadd.f32 %v1194, 0.0
        %v1197 = vstv %s318
        %v1198 = vmul.f32 %v1197, %v398
        %v1199 = vmul.f32 %v1197, %v399
        %v1200 = vadd.f32 %v1195, %v1198
        %v1201 = vadd.f32 %v1196, %v1199
        %v1202 = vstv %s270
        %v1203 = vmul.f32 %v1202, %v428
        %v1204 = vmul.f32 %v1202, %v429
        %v1205 = vadd.f32 %v1200, %v1203
        %v1206 = vadd.f32 %v1201, %v1204
        %v1207 = vstv %s319
        %v1208 = vmul.f32 %v1207, %v436
        %v1209 = vmul.f32 %v1207, %v437
        %v1210 = vadd.f32 %v1205, %v1208
        %v1211 = vadd.f32 %v1206, %v1209
        %v1212 = vstv %s271
        %v1213 = vmul.f32 %v1212, %v466
        %v1214 = vmul.f32 %v1212, %v467
        %v1215 = vadd.f32 %v1210, %v1213
        %v1216 = vadd.f32 %v1211, %v1214
        %v1217 = vstv %s320
        %v1218 = vmul.f32 %v1217, %v474
        %v1219 = vmul.f32 %v1217, %v475
        %v1220 = vadd.f32 %v1215, %v1218
        %v1221 = vadd.f32 %v1216, %v1219
        %v1222 = vstv %s272
        %v1223 = vmul.f32 %v1222, %v225
        %v1225 = vlaneseq
        %v1226 = vshrl.u32 %v1225, 7
        %v1227 = vsub.s32 0, %v1226
        %v1228 = vrot.slane %v1223, %v1227
        %v1229 = vlaneseq
        %v1230 = vshrl.u32 %v1229, 7
        %v1231 = vsub.s32 1, %v1230
        %v1232 = vrot.slane %v1223, %v1231
        %v1235 = vadd.f32 %v1220, %v1228
        %v1236 = vadd.f32 %v1221, %v1232
        %v1237 = vstv %s321
        %v1238 = vmul.f32 %v1237, %v226
        %v1240 = vlaneseq
        %v1241 = vshrl.u32 %v1240, 7
        %v1242 = vsub.s32 0, %v1241
        %v1243 = vrot.slane %v1238, %v1242
        %v1244 = vlaneseq
        %v1245 = vshrl.u32 %v1244, 7
        %v1246 = vsub.s32 1, %v1245
        %v1247 = vrot.slane %v1238, %v1246
        %v1250 = vadd.f32 %v1235, %v1243
        %v1251 = vadd.f32 %v1236, %v1247
        %v1252 = vstv %s273
        %v1253 = vmul.f32 %v1252, %v534
        %v1254 = vmul.f32 %v1252, %v535
        %v1255 = vadd.f32 %v1250, %v1253
        %v1256 = vadd.f32 %v1251, %v1254
        %v1257 = vstv %s322
        %v1258 = vmul.f32 %v1257, %v542
        %v1259 = vmul.f32 %v1257, %v543
        %v1260 = vadd.f32 %v1255, %v1258
        %v1261 = vadd.f32 %v1256, %v1259
        %v1262 = vstv %s274
        %v1263 = vmul.f32 %v1262, %v572
        %v1264 = vmul.f32 %v1262, %v573
        %v1265 = vadd.f32 %v1260, %v1263
        %v1266 = vadd.f32 %v1261, %v1264
        %v1267 = vstv %s323
        %v1268 = vmul.f32 %v1267, %v580
        %v1269 = vmul.f32 %v1267, %v581
        %v1270 = vadd.f32 %v1265, %v1268
        %v1271 = vadd.f32 %v1266, %v1269
        %v1272 = vstv %s275
        %v1273 = vmul.f32 %v1272, %v610
        %v1274 = vmul.f32 %v1272, %v611
        %v1275 = vadd.f32 %v1270, %v1273
        %v1276 = vadd.f32 %v1271, %v1274
        %v1277 = vstv %s324
        %v1278 = vmul.f32 %v1277, %v618
        %v1279 = vmul.f32 %v1277, %v619
        %v1280 = vadd.f32 %v1275, %v1278
        %v1281 = vadd.f32 %v1276, %v1279
        %1282 = vrot.lane.b32.xlu0 %v1280, 80
        %v1283 = vpop.permute.xlu0 %1282
        %1284 = vrot.lane.b32.xlu0 %v1281, 80
        %v1285 = vpop.permute.xlu0 %1284
        %vm1286 = vcmp.lt.s32.totalorder %v364, 80
        %v1287 = vsel %vm1286, %v1283, %v1285
        %v1288 = vsel %vm1286, %v1285, %v1283
        %v1290 = vlaneseq
        %v1291 = vshrl.u32 %v1290, 7
        %v1292 = vsub.s32 0, %v1291
        %v1293 = vrot.slane %v347, %v1292
        %v1294 = vlaneseq
        %v1295 = vshrl.u32 %v1294, 7
        %v1296 = vsub.s32 1, %v1295
        %v1297 = vrot.slane %v347, %v1296
        %v1300 = vmul.f32 %v1287, %v1293
        %v1301 = vmul.f32 %v1288, %v1297
        %v1302 = vadd.f32 %v1190, %v1300
        %v1303 = vadd.f32 %v1191, %v1301
        %v1304 = vsub.f32 0.0, %v1302
        %v1305 = vsub.f32 0.0, %v1303
        %v1306 = vmul.f32 %v1304, 1.442695
        %v1307 = vpow.pop %v1306
        %v1308 = vmul.f32 %v1305, 1.442695
        %v1309 = vpow.pop %v1308
        %v1310 = vadd.f32 %v1307, 1.0
        %v1311 = vadd.f32 %v1309, 1.0
        %v1312 = vrcp.pop %v1310
        %v1313 = vrcp.pop %v1311
        %v1316 = vcombine.low %v1312, %v1313
        %v1318 = vunpack.c.l.s4 1966171168
        %v1319 = vunpack.c.0.s8 %v1318
        %v1320 = vlaneseq
        %v1321 = vshrl.u32 %v1320, 7
        %v1322 = vsub.s32 %v1319, %v1321
        %v1323 = vrot.slane %v1316, %v1322
        %v1325 = vunpack.c.l.s4 1966171168
        %v1326 = vunpack.c.0.s8 %v1325
        %v1327 = vlaneseq
        %v1328 = vshrl.u32 %v1327, 7
        %v1329 = vsub.s32 %v1326, %v1328
        %v1330 = vrot.slane %v1323, %v1329
        %v1332 = vmul.f32 %v214, %v1330
        %v1333 = vlaneseq
        %vm1334 = vcmp.ge.s32.totalorder %v1333, 0
        %vm1335 = vcmp.lt.s32.totalorder %v1333, 256
        %vm1336 = vmand %vm1334, %vm1335
        %1337 = vst.msk [vmem:[%s213] ss:$4 sm:$0x3] %vm1336, %v1332
        %v1338 = vld [vmem:[%s215] ss:$4 sm:$0x3]
        %v1339 = vmul.f32 %v1338, %v1330
        %s1340 = scalar_lea.vmem %s213, 1 [#allocation9]
        %1341 = vst.msk [vmem:[%s1340] ss:$4 sm:$0x3] %vm1336, %v1339
        %v1342 = vld [vmem:[%s219] ss:$4 sm:$0x3]
        %v1343 = vmul.f32 %v1342, %v1330
        %s1344 = scalar_lea.vmem %s213, 2 [#allocation9]
        %1345 = vst.msk [vmem:[%s1344] ss:$4 sm:$0x3] %vm1336, %v1343
        %v1346 = vld [vmem:[%s223] ss:$4 sm:$0x3]
        %v1347 = vmul.f32 %v1346, %v1330
        %s1348 = scalar_lea.vmem %s213, 3 [#allocation9]
        %1349 = vst.msk [vmem:[%s1348] ss:$4 sm:$0x3] %vm1336, %v1347
        %s1350 = sand.u32 %s98, 1
        %s1351 = scalar_lea.sflag [#allocation4], %s1350
        %s1352 = sand.u32 %s98, 1
        %s1353 = smul.addr %s1352, 8
        %s1354 = scalar_lea.vmem [#allocation9], %s1353
        // Predicated region
        $region45: #{tpu_custom_call.1} parent=31 // pred_check
          %p1355 = pneg %p108
        $region46: #{tpu_custom_call.1} parent=31 // pred_check_branch
          %1357 = sbr.rel (%p1355) target = $region48
        $region47: #{tpu_custom_call.1} parent=31 // pred_region
          %s1359 = ssub.s32 128, 128
          %1360 = vsyncadd %s1351, %s1359
          %s1361 = smul.addr %s22, 2
          %s1362 = smul.addr %s1361, 64
          %s1363 = scalar_lea.hbm %s3, %s1362
          %s1365 = sshll.u32 %s1354, 4
          %s1366 = int_to_ptr.vmem [resolvable:$true] %s1365
          %1368 = dma.vmem_to_hbm [thread:$0]  %s1366, 128, %s1363, %s1351
        $region48: #{tpu_custom_call.1} parent=31 // pred_fallthru
          _
      $region32: #{tpu_custom_call.1} parent=5 // pred_fallthru
        _
      %p1369 = scmp.le.s32.totalorder 2, %s17
      // Predicated region
      $region49: #{tpu_custom_call.1} parent=5 // pred_check
        %p1370 = pneg %p1369
      $region50: #{tpu_custom_call.1} parent=5 // pred_check_branch
        %1372 = sbr.rel (%p1370) target = $region52
      $region51: #{tpu_custom_call.1} parent=5 // pred_region
        %s1373 = ssub.s32 %s17, 2
        // Predicated region
        $region53: #{tpu_custom_call.1} parent=51 // pred_check
          %p1374 = pneg %p114
        $region54: #{tpu_custom_call.1} parent=51 // pred_check_branch
          %1376 = sbr.rel (%p1374) target = $region56
        $region55: #{tpu_custom_call.1} parent=51 // pred_region
          %s1377 = sand.u32 %s99, 1
          %s1378 = scalar_lea.sflag [#allocation4], %s1377
          %s1379 = sand.u32 %s99, 1
          %s1380 = smul.addr %s1379, 8
          %s1381 = scalar_lea.vmem [#allocation9], %s1380
          %1382 = dma.done %s1378, 128
        $region56: #{tpu_custom_call.1} parent=51 // pred_fallthru
          _
      $region52: #{tpu_custom_call.1} parent=5 // pred_fallthru
        _
    $region6: #{tpu_custom_call.1} parent=1 // loop_footer
      %s21 = sadd.s32 1, %s17
    $region7: #{tpu_custom_call.1} parent=1 // loop_footer_branch
      %16 = sbr.rel target = $region3
    $region8: #{tpu_custom_call.1} parent=1 // loop_exit
      _
    %1383 = vsyncpa [#allocation3], 1
    %s1384 = scalar_lea.sflag [#allocation3], 1
    %1385 = vsyncpa %s1384, 1
    %1386 = vsyncpa [#allocation8], 1
    %s1387 = scalar_lea.sflag [#allocation8], 1
    %1388 = vsyncpa %s1387, 1
    %1389 = vsyncpa [#allocation4], 1
    %s1390 = scalar_lea.sflag [#allocation4], 1
    %1391 = vsyncpa %s1390, 1
    %1392 = vsyncpa [#allocation5], 1
    %s1393 = scalar_lea.sflag [#allocation5], 1
    %1394 = vsyncpa %s1393, 1

</llo_original>
